<compile_context>
chip_gen: v7x
topology: tpu7x:2x2x1
jax: 0.10.0
libtpu: 0.0.40
codegen_flags: <defaults>
</compile_context>

<pallas_src>
import functools

import jax
import jax.numpy as jnp
from jax.experimental import pallas as pl
from jax.experimental.pallas import tpu as pltpu

EPS = 1e-5  # PyTorch nn.LayerNorm default eps


def _layernorm(x, g, b):
    # single-sweep: E[x] and E[x^2] from one pass
    mu = jnp.mean(x, axis=-1, keepdims=True)
    ms = jnp.mean(x * x, axis=-1, keepdims=True)
    var = ms - mu * mu
    return (x - mu) * jax.lax.rsqrt(var + EPS) * g + b


def _softmax(s):
    m = jnp.max(s, axis=-1, keepdims=True)
    e = jnp.exp(s - m)
    return e * pl.reciprocal(jnp.sum(e, axis=-1, keepdims=True), approx=True)


def block_kernel(lamb_ref,                      # SMEM (1, 1)
                 x_ref,                         # (1, T, C) f32 (full sequence, resident per batch)
                 wq_ref,                        # (C, 2C) bf16  ([q1|q2], scale folded in)
                 wkv_ref,                       # (C, 3C) bf16  ([k1|k2|v])
                 ln1_g_ref, ln1_b_ref,          # (1, C)
                 ln2_g_ref, ln2_b_ref,          # (1, C)
                 nrm_g_ref, nrm_b_ref,          # (1, C)  (sa.norm)
                 w1_ref, b1_ref,                # (C, 4C) bf16, (1, 4C) f32
                 w2_ref, b2_ref,                # (4C, C) bf16, (1, C) f32
                 o_ref,                         # (1, tT, C) f32
                 kv_ref,                        # VMEM (T, 3C) bf16 scratch (per-batch K/V)
                 att_ref,                       # VMEM (tT, C) f32 scratch (head outputs)
                 *, tile_t, num_heads, head_size):
    C = x_ref.shape[2]
    lamb = lamb_ref[0, 0]
    t = pl.program_id(1)

    # ---- K/V for the whole sequence: compute once per batch element ----
    @pl.when(t == 0)
    def _():
        h_full = _layernorm(x_ref[0], ln1_g_ref[...], ln1_b_ref[...])
        kv = jnp.dot(h_full.astype(jnp.bfloat16), wkv_ref[...],
                     preferred_element_type=jnp.float32)
        kv_ref[...] = kv.astype(jnp.bfloat16)

    # ---- Q / residual tile ----
    row0 = pl.multiple_of(t * tile_t, tile_t)
    x_t = x_ref[0, pl.ds(row0, tile_t), :]                     # (tT, C) f32

    h_t = _layernorm(x_t, ln1_g_ref[...], ln1_b_ref[...])
    q = jnp.dot(h_t.astype(jnp.bfloat16), wq_ref[...],
                preferred_element_type=jnp.float32).astype(jnp.bfloat16)   # (tT, 2C)
    kv = kv_ref[...]                                           # (T, 3C) bf16

    # contract the last dim of both operands (q @ k^T without materializing a transpose)
    dn = (((1,), (1,)), ((), ()))
    for hi in range(num_heads):                                # static unroll over heads
        lo = hi * head_size
        hi_ = lo + head_size
        q1 = q[:, lo:hi_]
        q2 = q[:, C + lo:C + hi_]
        k1 = kv[:, lo:hi_]
        k2 = kv[:, C + lo:C + hi_]
        v = kv[:, 2 * C + lo:2 * C + hi_]

        s1 = jax.lax.dot_general(q1, k1, dn, preferred_element_type=jnp.float32)  # (tT, T)
        s2 = jax.lax.dot_general(q2, k2, dn, preferred_element_type=jnp.float32)
        wei = _softmax(s1) - lamb * _softmax(s2)
        att_ref[:, lo:hi_] = jnp.dot(wei.astype(jnp.bfloat16), v,
                                     preferred_element_type=jnp.float32)

    sa = (1.0 - lamb) * _layernorm(att_ref[...], nrm_g_ref[...], nrm_b_ref[...])
    x1 = x_t + sa

    # ---- feed-forward branch: ffwd(ln2(x1)) ----
    h2 = _layernorm(x1, ln2_g_ref[...], ln2_b_ref[...])
    hidden = jnp.maximum(
        jnp.dot(h2.astype(jnp.bfloat16), w1_ref[...],
                preferred_element_type=jnp.float32) + b1_ref[...], 0.0)
    ff = jnp.dot(hidden.astype(jnp.bfloat16), w2_ref[...],
                 preferred_element_type=jnp.float32) + b2_ref[...]

    o_ref[0] = x1 + ff


def _pick_seq_tile(T, target=256):
    """Largest multiple-of-8 divisor of T that is <= target (falls back to T)."""
    if T <= target:
        return T
    for cand in range(target - (target % 8), 7, -8):
        if T % cand == 0:
            return cand
    return T


def block_forward(x, params, *, seq_tile=256):
    B, T, C = x.shape
    H, _, hs = params["wq1"].shape
    hid = params["w1"].shape[1]
    scale = hs ** (-0.5)

    tT = _pick_seq_tile(T, seq_tile)
    nT = T // tT

    # stack per-head (C, hs) weights along the output dim -> (C, H*hs) = (C, C)
    stack = lambda w: jnp.transpose(w, (1, 0, 2)).reshape(C, H * hs)
    # fused projections (bf16 for MXU); fold the 1/sqrt(hs) score scale into W_q
    wq = jnp.concatenate([stack(params["wq1"]) * scale,
                          stack(params["wq2"]) * scale], axis=1).astype(jnp.bfloat16)
    wkv = jnp.concatenate([stack(params["wk1"]), stack(params["wk2"]),
                           stack(params["wv"])], axis=1).astype(jnp.bfloat16)
    w1 = params["w1"].astype(jnp.bfloat16)
    w2 = params["w2"].astype(jnp.bfloat16)

    full = lambda shape: pl.BlockSpec(shape, lambda b, t: tuple(0 for _ in shape))

    in_specs = [
        pl.BlockSpec(memory_space=pltpu.SMEM),                  # lamb
        pl.BlockSpec((1, T, C), lambda b, t: (b, 0, 0)),        # x (full sequence per batch)
        full((C, 2 * C)), full((C, 3 * C)),                     # wq, wkv
        full((1, C)), full((1, C)),                             # ln1 g, b
        full((1, C)), full((1, C)),                             # ln2 g, b
        full((1, C)), full((1, C)),                             # sa.norm g, b
        full((C, hid)), full((1, hid)),                         # ffwd W1, b1
        full((hid, C)), full((1, C)),                           # ffwd W2, b2
    ]

    kernel = functools.partial(block_kernel, tile_t=tT, num_heads=H, head_size=hs)

    return pl.pallas_call(
        kernel,
        out_shape=jax.ShapeDtypeStruct((B, T, C), jnp.float32),
        grid_spec=pltpu.PrefetchScalarGridSpec(
            num_scalar_prefetch=0,
            grid=(B, nT),
            in_specs=in_specs,
            out_specs=pl.BlockSpec((1, tT, C), lambda b, t: (b, t, 0)),
            scratch_shapes=[
                pltpu.VMEM((T, 3 * C), jnp.bfloat16),   # per-batch K1/K2/V slab
                pltpu.VMEM((tT, C), jnp.float32),       # per-tile head-output slab
            ]),
        compiler_params=pltpu.CompilerParams(
            dimension_semantics=("parallel", "arbitrary"),
            vmem_limit_bytes=64 * 1024 * 1024),
    )(params["lamb"], x, wq, wkv,
      params["ln1_g"], params["ln1_b"], params["ln2_g"], params["ln2_b"],
      params["nrm_g"], params["nrm_b"],
      w1, params["b1"], w2, params["b2"])


# ----- pure-JAX reference (mirrors the PyTorch forward, f32 everywhere) -----
def block_reference(x, p):
    lamb = p["lamb"][0, 0]

    def ln(x, g, b):
        mu = jnp.mean(x, axis=-1, keepdims=True)
        var = jnp.mean((x - mu) ** 2, axis=-1, keepdims=True)
        return (x - mu) / jnp.sqrt(var + EPS) * g + b

    h = ln(x, p["ln1_g"], p["ln1_b"])
    H, C, hs = p["wq1"].shape
    outs = []
    for hi in range(H):
        q1 = h @ p["wq1"][hi]; k1 = h @ p["wk1"][hi]
        q2 = h @ p["wq2"][hi]; k2 = h @ p["wk2"][hi]
        v = h @ p["wv"][hi]
        w1 = jax.nn.softmax(q1 @ jnp.swapaxes(k1, -1, -2) * hs ** (-0.5), axis=-1)
        w2 = jax.nn.softmax(q2 @ jnp.swapaxes(k2, -1, -2) * hs ** (-0.5), axis=-1)
        outs.append((w1 - lamb * w2) @ v)
    att = jnp.concatenate(outs, axis=-1)
    sa = (1.0 - lamb) * ln(att, p["nrm_g"], p["nrm_b"])
    x1 = x + sa
    h2 = ln(x1, p["ln2_g"], p["ln2_b"])
    ff = jnp.maximum(h2 @ p["w1"] + p["b1"], 0.0) @ p["w2"] + p["b2"]
    return x1 + ff


def make_params(key, C, H):
    hs = C // H
    hid = 4 * C
    ks = jax.random.split(key, 10)
    std = 0.02
    return {
        "lamb": jnp.full((1, 1), 0.8, jnp.float32),
        "wq1": jax.random.normal(ks[0], (H, C, hs), jnp.float32) * std,
        "wk1": jax.random.normal(ks[1], (H, C, hs), jnp.float32) * std,
        "wq2": jax.random.normal(ks[2], (H, C, hs), jnp.float32) * std,
        "wk2": jax.random.normal(ks[3], (H, C, hs), jnp.float32) * std,
        "wv":  jax.random.normal(ks[4], (H, C, hs), jnp.float32) * std,
        "ln1_g": jnp.ones((1, C), jnp.float32), "ln1_b": jnp.zeros((1, C), jnp.float32),
        "ln2_g": jnp.ones((1, C), jnp.float32), "ln2_b": jnp.zeros((1, C), jnp.float32),
        "nrm_g": jnp.ones((1, C), jnp.float32), "nrm_b": jnp.zeros((1, C), jnp.float32),
        "w1": jax.random.normal(ks[5], (C, hid), jnp.float32) * std,
        "b1": jax.random.normal(ks[6], (1, hid), jnp.float32) * std,
        "w2": jax.random.normal(ks[7], (hid, C), jnp.float32) * std,
        "b2": jax.random.normal(ks[8], (1, C), jnp.float32) * std,
    }


if __name__ == "__main__":
    B, T, C, H = 2, 8, 32, 4
    key = jax.random.PRNGKey(0)
    kx, kp = jax.random.split(key)
    x = jax.random.normal(kx, (B, T, C), jnp.float32)
    params = make_params(kp, C, H)

    out = block_forward(x, params)
    out = jax.block_until_ready(out)

    ref = block_reference(x, params)
    assert out.shape == (B, T, C)
    max_err = float(jnp.max(jnp.abs(out - ref)))
    # bf16 matmul inputs + approx reciprocal -> slightly looser tolerance than pure f32
    assert jnp.allclose(out, ref, rtol=1e-2, atol=1e-2), f"mismatch vs reference (max abs err {max_err})"

    print("KERNEL_OK")
</pallas_src>

<mosaic_0001>
module attributes {stable_mosaic.version = 11 : i64} {
  func.func @block_kernel(%arg0: i32, %arg1: i32, %arg2: memref<1x1xf32, #tpu.memory_space<smem>>, %arg3: memref<1x8x32xf32, #tpu.memory_space<vmem>>, %arg4: memref<32x64xbf16, #tpu.memory_space<vmem>>, %arg5: memref<32x96xbf16, #tpu.memory_space<vmem>>, %arg6: memref<1x32xf32, #tpu.memory_space<vmem>>, %arg7: memref<1x32xf32, #tpu.memory_space<vmem>>, %arg8: memref<1x32xf32, #tpu.memory_space<vmem>>, %arg9: memref<1x32xf32, #tpu.memory_space<vmem>>, %arg10: memref<1x32xf32, #tpu.memory_space<vmem>>, %arg11: memref<1x32xf32, #tpu.memory_space<vmem>>, %arg12: memref<32x128xbf16, #tpu.memory_space<vmem>>, %arg13: memref<1x128xf32, #tpu.memory_space<vmem>>, %arg14: memref<128x32xbf16, #tpu.memory_space<vmem>>, %arg15: memref<1x32xf32, #tpu.memory_space<vmem>>, %arg16: memref<1x8x32xf32, #tpu.memory_space<vmem>>, %arg17: memref<8x96xbf16, #tpu.memory_space<vmem>>, %arg18: memref<8x32xf32, #tpu.memory_space<vmem>>) attributes {dimension_semantics = [#tpu.dimension_semantics<parallel>, #tpu.dimension_semantics<arbitrary>], iteration_bounds = array<i64: 2, 1>, scalar_prefetch = 0 : i64, scratch_operands = 2 : i64, tpu.core_type = #tpu.core_type<tc>, window_params = [{transform_indices = @transform_0, window_bounds = array<i64: 1, 1>}, {transform_indices = @transform_1, window_bounds = array<i64: 1, 8, 32>}, {pipeline_mode = #tpu.pipeline_mode<synchronous>, transform_indices = @transform_2, window_bounds = array<i64: 32, 64>}, {pipeline_mode = #tpu.pipeline_mode<synchronous>, transform_indices = @transform_3, window_bounds = array<i64: 32, 96>}, {pipeline_mode = #tpu.pipeline_mode<synchronous>, transform_indices = @transform_4, window_bounds = array<i64: 1, 32>}, {pipeline_mode = #tpu.pipeline_mode<synchronous>, transform_indices = @transform_5, window_bounds = array<i64: 1, 32>}, {pipeline_mode = #tpu.pipeline_mode<synchronous>, transform_indices = @transform_6, window_bounds = array<i64: 1, 32>}, {pipeline_mode = #tpu.pipeline_mode<synchronous>, transform_indices = @transform_7, window_bounds = array<i64: 1, 32>}, {pipeline_mode = #tpu.pipeline_mode<synchronous>, transform_indices = @transform_8, window_bounds = array<i64: 1, 32>}, {pipeline_mode = #tpu.pipeline_mode<synchronous>, transform_indices = @transform_9, window_bounds = array<i64: 1, 32>}, {pipeline_mode = #tpu.pipeline_mode<synchronous>, transform_indices = @transform_10, window_bounds = array<i64: 32, 128>}, {pipeline_mode = #tpu.pipeline_mode<synchronous>, transform_indices = @transform_11, window_bounds = array<i64: 1, 128>}, {pipeline_mode = #tpu.pipeline_mode<synchronous>, transform_indices = @transform_12, window_bounds = array<i64: 128, 32>}, {pipeline_mode = #tpu.pipeline_mode<synchronous>, transform_indices = @transform_13, window_bounds = array<i64: 1, 32>}, {transform_indices = @transform_14, window_bounds = array<i64: 1, 8, 32>}]} {
    %c0 = arith.constant 0 : index
    %c0_0 = arith.constant 0 : index
    %0 = memref.load %arg2[%c0, %c0_0] : memref<1x1xf32, #tpu.memory_space<smem>>
    %c0_i32 = arith.constant 0 : i32
    %1 = arith.cmpi eq, %arg1, %c0_i32 : i32
    %2 = arith.extui %1 : i1 to i32
    %c0_i32_1 = arith.constant 0 : i32
    %3 = arith.cmpi ne, %2, %c0_i32_1 : i32
    scf.if %3 {
      %c0_85 = arith.constant 0 : index
      %c0_86 = arith.constant 0 : index
      %c0_87 = arith.constant 0 : index
      %241 = vector.load %arg3[%c0_85, %c0_86, %c0_87] : memref<1x8x32xf32, #tpu.memory_space<vmem>>, vector<1x8x32xf32>
      %242 = vector.shape_cast %241 : vector<1x8x32xf32> to vector<8x32xf32>
      %c0_88 = arith.constant 0 : index
      %c0_89 = arith.constant 0 : index
      %243 = vector.load %arg6[%c0_88, %c0_89] : memref<1x32xf32, #tpu.memory_space<vmem>>, vector<1x32xf32>
      %c0_90 = arith.constant 0 : index
      %c0_91 = arith.constant 0 : index
      %244 = vector.load %arg7[%c0_90, %c0_91] : memref<1x32xf32, #tpu.memory_space<vmem>>, vector<1x32xf32>
      %cst_92 = arith.constant dense<0.000000e+00> : vector<8xf32>
      %245 = vector.multi_reduction <add>, %242, %cst_92 [1] : vector<8x32xf32> to vector<8xf32>
      %246 = vector.shape_cast %245 : vector<8xf32> to vector<8x1xf32>
      %cst_93 = arith.constant 3.200000e+01 : f32
      %247 = vector.broadcast %cst_93 : f32 to vector<8x1xf32>
      %248 = arith.divf %246, %247 : vector<8x1xf32>
      %249 = arith.mulf %242, %242 : vector<8x32xf32>
      %cst_94 = arith.constant dense<0.000000e+00> : vector<8xf32>
      %250 = vector.multi_reduction <add>, %249, %cst_94 [1] : vector<8x32xf32> to vector<8xf32>
      %251 = vector.shape_cast %250 : vector<8xf32> to vector<8x1xf32>
      %cst_95 = arith.constant 3.200000e+01 : f32
      %252 = vector.broadcast %cst_95 : f32 to vector<8x1xf32>
      %253 = arith.divf %251, %252 : vector<8x1xf32>
      %254 = arith.mulf %248, %248 : vector<8x1xf32>
      %255 = arith.subf %253, %254 : vector<8x1xf32>
      %256 = vector.broadcast %248 : vector<8x1xf32> to vector<8x32xf32>
      %257 = arith.subf %242, %256 : vector<8x32xf32>
      %cst_96 = arith.constant 9.99999974E-6 : f32
      %258 = vector.broadcast %cst_96 : f32 to vector<8x1xf32>
      %259 = arith.addf %255, %258 : vector<8x1xf32>
      %260 = math.rsqrt %259 : vector<8x1xf32>
      %261 = vector.broadcast %260 : vector<8x1xf32> to vector<8x32xf32>
      %262 = arith.mulf %257, %261 : vector<8x32xf32>
      %263 = vector.broadcast %243 : vector<1x32xf32> to vector<8x32xf32>
      %264 = arith.mulf %262, %263 : vector<8x32xf32>
      %265 = vector.broadcast %244 : vector<1x32xf32> to vector<8x32xf32>
      %266 = arith.addf %264, %265 : vector<8x32xf32>
      %267 = arith.truncf %266 : vector<8x32xf32> to vector<8x32xbf16>
      %c0_97 = arith.constant 0 : index
      %c0_98 = arith.constant 0 : index
      %268 = vector.load %arg5[%c0_97, %c0_98] : memref<32x96xbf16, #tpu.memory_space<vmem>>, vector<32x96xbf16>
      %cst_99 = arith.constant dense<0.000000e+00> : vector<8x96xf32>
      %269 = tpu.matmul %267, %268, %cst_99 {dimension_numbers = #tpu.dot_dimension_numbers<[1], [0], [0], [1], [0, 0, 1, 1], [], []>} : vector<8x32xbf16>, vector<32x96xbf16>, vector<8x96xf32> -> vector<8x96xf32>
      %270 = arith.truncf %269 : vector<8x96xf32> to vector<8x96xbf16>
      %c0_100 = arith.constant 0 : index
      %c0_101 = arith.constant 0 : index
      %271 = vector.load %arg17[%c0_100, %c0_101] : memref<8x96xbf16, #tpu.memory_space<vmem>>, vector<8x96xbf16>
      tpu.vector_store %arg17[%c0_100, %c0_101], %270 {strides = array<i32>} : memref<8x96xbf16, #tpu.memory_space<vmem>>, vector<8x96xbf16>,
    } else {
    }
    %c8_i32 = arith.constant 8 : i32
    %4 = arith.muli %arg1, %c8_i32 : i32
    %5 = tpu.assume_multiple %4, 8 : i32
    %c0_2 = arith.constant 0 : index
    %6 = arith.index_cast %5 : i32 to index
    %c0_3 = arith.constant 0 : index
    %7 = vector.load %arg3[%c0_2, %6, %c0_3] : memref<1x8x32xf32, #tpu.memory_space<vmem>>, vector<1x8x32xf32>
    %8 = vector.shape_cast %7 : vector<1x8x32xf32> to vector<8x32xf32>
    %c0_4 = arith.constant 0 : index
    %c0_5 = arith.constant 0 : index
    %9 = vector.load %arg6[%c0_4, %c0_5] : memref<1x32xf32, #tpu.memory_space<vmem>>, vector<1x32xf32>
    %c0_6 = arith.constant 0 : index
    %c0_7 = arith.constant 0 : index
    %10 = vector.load %arg7[%c0_6, %c0_7] : memref<1x32xf32, #tpu.memory_space<vmem>>, vector<1x32xf32>
    %cst = arith.constant dense<0.000000e+00> : vector<8xf32>
    %11 = vector.multi_reduction <add>, %8, %cst [1] : vector<8x32xf32> to vector<8xf32>
    %12 = vector.shape_cast %11 : vector<8xf32> to vector<8x1xf32>
    %cst_8 = arith.constant 3.200000e+01 : f32
    %13 = vector.broadcast %cst_8 : f32 to vector<8x1xf32>
    %14 = arith.divf %12, %13 : vector<8x1xf32>
    %15 = arith.mulf %8, %8 : vector<8x32xf32>
    %cst_9 = arith.constant dense<0.000000e+00> : vector<8xf32>
    %16 = vector.multi_reduction <add>, %15, %cst_9 [1] : vector<8x32xf32> to vector<8xf32>
    %17 = vector.shape_cast %16 : vector<8xf32> to vector<8x1xf32>
    %cst_10 = arith.constant 3.200000e+01 : f32
    %18 = vector.broadcast %cst_10 : f32 to vector<8x1xf32>
    %19 = arith.divf %17, %18 : vector<8x1xf32>
    %20 = arith.mulf %14, %14 : vector<8x1xf32>
    %21 = arith.subf %19, %20 : vector<8x1xf32>
    %22 = vector.broadcast %14 : vector<8x1xf32> to vector<8x32xf32>
    %23 = arith.subf %8, %22 : vector<8x32xf32>
    %cst_11 = arith.constant 9.99999974E-6 : f32
    %24 = vector.broadcast %cst_11 : f32 to vector<8x1xf32>
    %25 = arith.addf %21, %24 : vector<8x1xf32>
    %26 = math.rsqrt %25 : vector<8x1xf32>
    %27 = vector.broadcast %26 : vector<8x1xf32> to vector<8x32xf32>
    %28 = arith.mulf %23, %27 : vector<8x32xf32>
    %29 = vector.broadcast %9 : vector<1x32xf32> to vector<8x32xf32>
    %30 = arith.mulf %28, %29 : vector<8x32xf32>
    %31 = vector.broadcast %10 : vector<1x32xf32> to vector<8x32xf32>
    %32 = arith.addf %30, %31 : vector<8x32xf32>
    %33 = arith.truncf %32 : vector<8x32xf32> to vector<8x32xbf16>
    %c0_12 = arith.constant 0 : index
    %c0_13 = arith.constant 0 : index
    %34 = vector.load %arg4[%c0_12, %c0_13] : memref<32x64xbf16, #tpu.memory_space<vmem>>, vector<32x64xbf16>
    %cst_14 = arith.constant dense<0.000000e+00> : vector<8x64xf32>
    %35 = tpu.matmul %33, %34, %cst_14 {dimension_numbers = #tpu.dot_dimension_numbers<[1], [0], [0], [1], [0, 0, 1, 1], [], []>} : vector<8x32xbf16>, vector<32x64xbf16>, vector<8x64xf32> -> vector<8x64xf32>
    %36 = arith.truncf %35 : vector<8x64xf32> to vector<8x64xbf16>
    %c0_15 = arith.constant 0 : index
    %c0_16 = arith.constant 0 : index
    %37 = vector.load %arg17[%c0_15, %c0_16] : memref<8x96xbf16, #tpu.memory_space<vmem>>, vector<8x96xbf16>
    %38 = vector.extract_strided_slice %36 {offsets = [0, 0], sizes = [8, 8], strides = [1, 1]} : vector<8x64xbf16> to vector<8x8xbf16>
    %39 = vector.extract_strided_slice %36 {offsets = [0, 32], sizes = [8, 8], strides = [1, 1]} : vector<8x64xbf16> to vector<8x8xbf16>
    %40 = vector.extract_strided_slice %37 {offsets = [0, 0], sizes = [8, 8], strides = [1, 1]} : vector<8x96xbf16> to vector<8x8xbf16>
    %41 = vector.extract_strided_slice %37 {offsets = [0, 32], sizes = [8, 8], strides = [1, 1]} : vector<8x96xbf16> to vector<8x8xbf16>
    %42 = vector.extract_strided_slice %37 {offsets = [0, 64], sizes = [8, 8], strides = [1, 1]} : vector<8x96xbf16> to vector<8x8xbf16>
    %cst_17 = arith.constant dense<0.000000e+00> : vector<8x8xf32>
    %43 = tpu.matmul %38, %40, %cst_17 {dimension_numbers = #tpu.dot_dimension_numbers<[1], [1], [0], [0], [0, 0, 1, 0], [], []>} : vector<8x8xbf16>, vector<8x8xbf16>, vector<8x8xf32> -> vector<8x8xf32>
    %cst_18 = arith.constant dense<0.000000e+00> : vector<8x8xf32>
    %44 = tpu.matmul %39, %41, %cst_18 {dimension_numbers = #tpu.dot_dimension_numbers<[1], [1], [0], [0], [0, 0, 1, 0], [], []>} : vector<8x8xbf16>, vector<8x8xbf16>, vector<8x8xf32> -> vector<8x8xf32>
    %cst_19 = arith.constant dense<0xFF800000> : vector<8xf32>
    %45 = vector.multi_reduction <maximumf>, %43, %cst_19 [1] : vector<8x8xf32> to vector<8xf32>
    %46 = vector.shape_cast %45 : vector<8xf32> to vector<8x1xf32>
    %47 = vector.broadcast %46 : vector<8x1xf32> to vector<8x8xf32>
    %48 = arith.subf %43, %47 : vector<8x8xf32>
    %49 = math.exp %48 : vector<8x8xf32>
    %cst_20 = arith.constant dense<0.000000e+00> : vector<8xf32>
    %50 = vector.multi_reduction <add>, %49, %cst_20 [1] : vector<8x8xf32> to vector<8xf32>
    %51 = vector.shape_cast %50 : vector<8xf32> to vector<8x1xf32>
    %52 = tpu.reciprocal %51 {approx = true} : vector<8x1xf32> -> vector<8x1xf32>
    %53 = vector.broadcast %52 : vector<8x1xf32> to vector<8x8xf32>
    %54 = arith.mulf %49, %53 : vector<8x8xf32>
    %cst_21 = arith.constant dense<0xFF800000> : vector<8xf32>
    %55 = vector.multi_reduction <maximumf>, %44, %cst_21 [1] : vector<8x8xf32> to vector<8xf32>
    %56 = vector.shape_cast %55 : vector<8xf32> to vector<8x1xf32>
    %57 = vector.broadcast %56 : vector<8x1xf32> to vector<8x8xf32>
    %58 = arith.subf %44, %57 : vector<8x8xf32>
    %59 = math.exp %58 : vector<8x8xf32>
    %cst_22 = arith.constant dense<0.000000e+00> : vector<8xf32>
    %60 = vector.multi_reduction <add>, %59, %cst_22 [1] : vector<8x8xf32> to vector<8xf32>
    %61 = vector.shape_cast %60 : vector<8xf32> to vector<8x1xf32>
    %62 = tpu.reciprocal %61 {approx = true} : vector<8x1xf32> -> vector<8x1xf32>
    %63 = vector.broadcast %62 : vector<8x1xf32> to vector<8x8xf32>
    %64 = arith.mulf %59, %63 : vector<8x8xf32>
    %65 = vector.broadcast %0 : f32 to vector<8x8xf32>
    %66 = arith.mulf %65, %64 : vector<8x8xf32>
    %67 = arith.subf %54, %66 : vector<8x8xf32>
    %68 = arith.truncf %67 : vector<8x8xf32> to vector<8x8xbf16>
    %cst_23 = arith.constant dense<0.000000e+00> : vector<8x8xf32>
    %69 = tpu.matmul %68, %42, %cst_23 {dimension_numbers = #tpu.dot_dimension_numbers<[1], [0], [0], [1], [0, 0, 1, 1], [], []>} : vector<8x8xbf16>, vector<8x8xbf16>, vector<8x8xf32> -> vector<8x8xf32>
    %c0_24 = arith.constant 0 : index
    %c0_25 = arith.constant 0 : index
    %70 = vector.load %arg18[%c0_24, %c0_25] : memref<8x32xf32, #tpu.memory_space<vmem>>, vector<8x8xf32>
    tpu.vector_store %arg18[%c0_24, %c0_25], %69 {strides = array<i32>} : memref<8x32xf32, #tpu.memory_space<vmem>>, vector<8x8xf32>,
    %71 = vector.extract_strided_slice %36 {offsets = [0, 8], sizes = [8, 8], strides = [1, 1]} : vector<8x64xbf16> to vector<8x8xbf16>
    %72 = vector.extract_strided_slice %36 {offsets = [0, 40], sizes = [8, 8], strides = [1, 1]} : vector<8x64xbf16> to vector<8x8xbf16>
    %73 = vector.extract_strided_slice %37 {offsets = [0, 8], sizes = [8, 8], strides = [1, 1]} : vector<8x96xbf16> to vector<8x8xbf16>
    %74 = vector.extract_strided_slice %37 {offsets = [0, 40], sizes = [8, 8], strides = [1, 1]} : vector<8x96xbf16> to vector<8x8xbf16>
    %75 = vector.extract_strided_slice %37 {offsets = [0, 72], sizes = [8, 8], strides = [1, 1]} : vector<8x96xbf16> to vector<8x8xbf16>
    %cst_26 = arith.constant dense<0.000000e+00> : vector<8x8xf32>
    %76 = tpu.matmul %71, %73, %cst_26 {dimension_numbers = #tpu.dot_dimension_numbers<[1], [1], [0], [0], [0, 0, 1, 0], [], []>} : vector<8x8xbf16>, vector<8x8xbf16>, vector<8x8xf32> -> vector<8x8xf32>
    %cst_27 = arith.constant dense<0.000000e+00> : vector<8x8xf32>
    %77 = tpu.matmul %72, %74, %cst_27 {dimension_numbers = #tpu.dot_dimension_numbers<[1], [1], [0], [0], [0, 0, 1, 0], [], []>} : vector<8x8xbf16>, vector<8x8xbf16>, vector<8x8xf32> -> vector<8x8xf32>
    %cst_28 = arith.constant dense<0xFF800000> : vector<8xf32>
    %78 = vector.multi_reduction <maximumf>, %76, %cst_28 [1] : vector<8x8xf32> to vector<8xf32>
    %79 = vector.shape_cast %78 : vector<8xf32> to vector<8x1xf32>
    %80 = vector.broadcast %79 : vector<8x1xf32> to vector<8x8xf32>
    %81 = arith.subf %76, %80 : vector<8x8xf32>
    %82 = math.exp %81 : vector<8x8xf32>
    %cst_29 = arith.constant dense<0.000000e+00> : vector<8xf32>
    %83 = vector.multi_reduction <add>, %82, %cst_29 [1] : vector<8x8xf32> to vector<8xf32>
    %84 = vector.shape_cast %83 : vector<8xf32> to vector<8x1xf32>
    %85 = tpu.reciprocal %84 {approx = true} : vector<8x1xf32> -> vector<8x1xf32>
    %86 = vector.broadcast %85 : vector<8x1xf32> to vector<8x8xf32>
    %87 = arith.mulf %82, %86 : vector<8x8xf32>
    %cst_30 = arith.constant dense<0xFF800000> : vector<8xf32>
    %88 = vector.multi_reduction <maximumf>, %77, %cst_30 [1] : vector<8x8xf32> to vector<8xf32>
    %89 = vector.shape_cast %88 : vector<8xf32> to vector<8x1xf32>
    %90 = vector.broadcast %89 : vector<8x1xf32> to vector<8x8xf32>
    %91 = arith.subf %77, %90 : vector<8x8xf32>
    %92 = math.exp %91 : vector<8x8xf32>
    %cst_31 = arith.constant dense<0.000000e+00> : vector<8xf32>
    %93 = vector.multi_reduction <add>, %92, %cst_31 [1] : vector<8x8xf32> to vector<8xf32>
    %94 = vector.shape_cast %93 : vector<8xf32> to vector<8x1xf32>
    %95 = tpu.reciprocal %94 {approx = true} : vector<8x1xf32> -> vector<8x1xf32>
    %96 = vector.broadcast %95 : vector<8x1xf32> to vector<8x8xf32>
    %97 = arith.mulf %92, %96 : vector<8x8xf32>
    %98 = vector.broadcast %0 : f32 to vector<8x8xf32>
    %99 = arith.mulf %98, %97 : vector<8x8xf32>
    %100 = arith.subf %87, %99 : vector<8x8xf32>
    %101 = arith.truncf %100 : vector<8x8xf32> to vector<8x8xbf16>
    %cst_32 = arith.constant dense<0.000000e+00> : vector<8x8xf32>
    %102 = tpu.matmul %101, %75, %cst_32 {dimension_numbers = #tpu.dot_dimension_numbers<[1], [0], [0], [1], [0, 0, 1, 1], [], []>} : vector<8x8xbf16>, vector<8x8xbf16>, vector<8x8xf32> -> vector<8x8xf32>
    %c0_33 = arith.constant 0 : index
    %c8 = arith.constant 8 : index
    %103 = vector.load %arg18[%c0_33, %c8] : memref<8x32xf32, #tpu.memory_space<vmem>>, vector<8x8xf32>
    tpu.vector_store %arg18[%c0_33, %c8], %102 {strides = array<i32>} : memref<8x32xf32, #tpu.memory_space<vmem>>, vector<8x8xf32>,
    %104 = vector.extract_strided_slice %36 {offsets = [0, 16], sizes = [8, 8], strides = [1, 1]} : vector<8x64xbf16> to vector<8x8xbf16>
    %105 = vector.extract_strided_slice %36 {offsets = [0, 48], sizes = [8, 8], strides = [1, 1]} : vector<8x64xbf16> to vector<8x8xbf16>
    %106 = vector.extract_strided_slice %37 {offsets = [0, 16], sizes = [8, 8], strides = [1, 1]} : vector<8x96xbf16> to vector<8x8xbf16>
    %107 = vector.extract_strided_slice %37 {offsets = [0, 48], sizes = [8, 8], strides = [1, 1]} : vector<8x96xbf16> to vector<8x8xbf16>
    %108 = vector.extract_strided_slice %37 {offsets = [0, 80], sizes = [8, 8], strides = [1, 1]} : vector<8x96xbf16> to vector<8x8xbf16>
    %cst_34 = arith.constant dense<0.000000e+00> : vector<8x8xf32>
    %109 = tpu.matmul %104, %106, %cst_34 {dimension_numbers = #tpu.dot_dimension_numbers<[1], [1], [0], [0], [0, 0, 1, 0], [], []>} : vector<8x8xbf16>, vector<8x8xbf16>, vector<8x8xf32> -> vector<8x8xf32>
    %cst_35 = arith.constant dense<0.000000e+00> : vector<8x8xf32>
    %110 = tpu.matmul %105, %107, %cst_35 {dimension_numbers = #tpu.dot_dimension_numbers<[1], [1], [0], [0], [0, 0, 1, 0], [], []>} : vector<8x8xbf16>, vector<8x8xbf16>, vector<8x8xf32> -> vector<8x8xf32>
    %cst_36 = arith.constant dense<0xFF800000> : vector<8xf32>
    %111 = vector.multi_reduction <maximumf>, %109, %cst_36 [1] : vector<8x8xf32> to vector<8xf32>
    %112 = vector.shape_cast %111 : vector<8xf32> to vector<8x1xf32>
    %113 = vector.broadcast %112 : vector<8x1xf32> to vector<8x8xf32>
    %114 = arith.subf %109, %113 : vector<8x8xf32>
    %115 = math.exp %114 : vector<8x8xf32>
    %cst_37 = arith.constant dense<0.000000e+00> : vector<8xf32>
    %116 = vector.multi_reduction <add>, %115, %cst_37 [1] : vector<8x8xf32> to vector<8xf32>
    %117 = vector.shape_cast %116 : vector<8xf32> to vector<8x1xf32>
    %118 = tpu.reciprocal %117 {approx = true} : vector<8x1xf32> -> vector<8x1xf32>
    %119 = vector.broadcast %118 : vector<8x1xf32> to vector<8x8xf32>
    %120 = arith.mulf %115, %119 : vector<8x8xf32>
    %cst_38 = arith.constant dense<0xFF800000> : vector<8xf32>
    %121 = vector.multi_reduction <maximumf>, %110, %cst_38 [1] : vector<8x8xf32> to vector<8xf32>
    %122 = vector.shape_cast %121 : vector<8xf32> to vector<8x1xf32>
    %123 = vector.broadcast %122 : vector<8x1xf32> to vector<8x8xf32>
    %124 = arith.subf %110, %123 : vector<8x8xf32>
    %125 = math.exp %124 : vector<8x8xf32>
    %cst_39 = arith.constant dense<0.000000e+00> : vector<8xf32>
    %126 = vector.multi_reduction <add>, %125, %cst_39 [1] : vector<8x8xf32> to vector<8xf32>
    %127 = vector.shape_cast %126 : vector<8xf32> to vector<8x1xf32>
    %128 = tpu.reciprocal %127 {approx = true} : vector<8x1xf32> -> vector<8x1xf32>
    %129 = vector.broadcast %128 : vector<8x1xf32> to vector<8x8xf32>
    %130 = arith.mulf %125, %129 : vector<8x8xf32>
    %131 = vector.broadcast %0 : f32 to vector<8x8xf32>
    %132 = arith.mulf %131, %130 : vector<8x8xf32>
    %133 = arith.subf %120, %132 : vector<8x8xf32>
    %134 = arith.truncf %133 : vector<8x8xf32> to vector<8x8xbf16>
    %cst_40 = arith.constant dense<0.000000e+00> : vector<8x8xf32>
    %135 = tpu.matmul %134, %108, %cst_40 {dimension_numbers = #tpu.dot_dimension_numbers<[1], [0], [0], [1], [0, 0, 1, 1], [], []>} : vector<8x8xbf16>, vector<8x8xbf16>, vector<8x8xf32> -> vector<8x8xf32>
    %c0_41 = arith.constant 0 : index
    %c16 = arith.constant 16 : index
    %136 = vector.load %arg18[%c0_41, %c16] : memref<8x32xf32, #tpu.memory_space<vmem>>, vector<8x8xf32>
    tpu.vector_store %arg18[%c0_41, %c16], %135 {strides = array<i32>} : memref<8x32xf32, #tpu.memory_space<vmem>>, vector<8x8xf32>,
    %137 = vector.extract_strided_slice %36 {offsets = [0, 24], sizes = [8, 8], strides = [1, 1]} : vector<8x64xbf16> to vector<8x8xbf16>
    %138 = vector.extract_strided_slice %36 {offsets = [0, 56], sizes = [8, 8], strides = [1, 1]} : vector<8x64xbf16> to vector<8x8xbf16>
    %139 = vector.extract_strided_slice %37 {offsets = [0, 24], sizes = [8, 8], strides = [1, 1]} : vector<8x96xbf16> to vector<8x8xbf16>
    %140 = vector.extract_strided_slice %37 {offsets = [0, 56], sizes = [8, 8], strides = [1, 1]} : vector<8x96xbf16> to vector<8x8xbf16>
    %141 = vector.extract_strided_slice %37 {offsets = [0, 88], sizes = [8, 8], strides = [1, 1]} : vector<8x96xbf16> to vector<8x8xbf16>
    %cst_42 = arith.constant dense<0.000000e+00> : vector<8x8xf32>
    %142 = tpu.matmul %137, %139, %cst_42 {dimension_numbers = #tpu.dot_dimension_numbers<[1], [1], [0], [0], [0, 0, 1, 0], [], []>} : vector<8x8xbf16>, vector<8x8xbf16>, vector<8x8xf32> -> vector<8x8xf32>
    %cst_43 = arith.constant dense<0.000000e+00> : vector<8x8xf32>
    %143 = tpu.matmul %138, %140, %cst_43 {dimension_numbers = #tpu.dot_dimension_numbers<[1], [1], [0], [0], [0, 0, 1, 0], [], []>} : vector<8x8xbf16>, vector<8x8xbf16>, vector<8x8xf32> -> vector<8x8xf32>
    %cst_44 = arith.constant dense<0xFF800000> : vector<8xf32>
    %144 = vector.multi_reduction <maximumf>, %142, %cst_44 [1] : vector<8x8xf32> to vector<8xf32>
    %145 = vector.shape_cast %144 : vector<8xf32> to vector<8x1xf32>
    %146 = vector.broadcast %145 : vector<8x1xf32> to vector<8x8xf32>
    %147 = arith.subf %142, %146 : vector<8x8xf32>
    %148 = math.exp %147 : vector<8x8xf32>
    %cst_45 = arith.constant dense<0.000000e+00> : vector<8xf32>
    %149 = vector.multi_reduction <add>, %148, %cst_45 [1] : vector<8x8xf32> to vector<8xf32>
    %150 = vector.shape_cast %149 : vector<8xf32> to vector<8x1xf32>
    %151 = tpu.reciprocal %150 {approx = true} : vector<8x1xf32> -> vector<8x1xf32>
    %152 = vector.broadcast %151 : vector<8x1xf32> to vector<8x8xf32>
    %153 = arith.mulf %148, %152 : vector<8x8xf32>
    %cst_46 = arith.constant dense<0xFF800000> : vector<8xf32>
    %154 = vector.multi_reduction <maximumf>, %143, %cst_46 [1] : vector<8x8xf32> to vector<8xf32>
    %155 = vector.shape_cast %154 : vector<8xf32> to vector<8x1xf32>
    %156 = vector.broadcast %155 : vector<8x1xf32> to vector<8x8xf32>
    %157 = arith.subf %143, %156 : vector<8x8xf32>
    %158 = math.exp %157 : vector<8x8xf32>
    %cst_47 = arith.constant dense<0.000000e+00> : vector<8xf32>
    %159 = vector.multi_reduction <add>, %158, %cst_47 [1] : vector<8x8xf32> to vector<8xf32>
    %160 = vector.shape_cast %159 : vector<8xf32> to vector<8x1xf32>
    %161 = tpu.reciprocal %160 {approx = true} : vector<8x1xf32> -> vector<8x1xf32>
    %162 = vector.broadcast %161 : vector<8x1xf32> to vector<8x8xf32>
    %163 = arith.mulf %158, %162 : vector<8x8xf32>
    %164 = vector.broadcast %0 : f32 to vector<8x8xf32>
    %165 = arith.mulf %164, %163 : vector<8x8xf32>
    %166 = arith.subf %153, %165 : vector<8x8xf32>
    %167 = arith.truncf %166 : vector<8x8xf32> to vector<8x8xbf16>
    %cst_48 = arith.constant dense<0.000000e+00> : vector<8x8xf32>
    %168 = tpu.matmul %167, %141, %cst_48 {dimension_numbers = #tpu.dot_dimension_numbers<[1], [0], [0], [1], [0, 0, 1, 1], [], []>} : vector<8x8xbf16>, vector<8x8xbf16>, vector<8x8xf32> -> vector<8x8xf32>
    %c0_49 = arith.constant 0 : index
    %c24 = arith.constant 24 : index
    %169 = vector.load %arg18[%c0_49, %c24] : memref<8x32xf32, #tpu.memory_space<vmem>>, vector<8x8xf32>
    tpu.vector_store %arg18[%c0_49, %c24], %168 {strides = array<i32>} : memref<8x32xf32, #tpu.memory_space<vmem>>, vector<8x8xf32>,
    %cst_50 = arith.constant 1.000000e+00 : f32
    %170 = arith.subf %cst_50, %0 : f32
    %c0_51 = arith.constant 0 : index
    %c0_52 = arith.constant 0 : index
    %171 = vector.load %arg18[%c0_51, %c0_52] : memref<8x32xf32, #tpu.memory_space<vmem>>, vector<8x32xf32>
    %c0_53 = arith.constant 0 : index
    %c0_54 = arith.constant 0 : index
    %172 = vector.load %arg10[%c0_53, %c0_54] : memref<1x32xf32, #tpu.memory_space<vmem>>, vector<1x32xf32>
    %c0_55 = arith.constant 0 : index
    %c0_56 = arith.constant 0 : index
    %173 = vector.load %arg11[%c0_55, %c0_56] : memref<1x32xf32, #tpu.memory_space<vmem>>, vector<1x32xf32>
    %cst_57 = arith.constant dense<0.000000e+00> : vector<8xf32>
    %174 = vector.multi_reduction <add>, %171, %cst_57 [1] : vector<8x32xf32> to vector<8xf32>
    %175 = vector.shape_cast %174 : vector<8xf32> to vector<8x1xf32>
    %cst_58 = arith.constant 3.200000e+01 : f32
    %176 = vector.broadcast %cst_58 : f32 to vector<8x1xf32>
    %177 = arith.divf %175, %176 : vector<8x1xf32>
    %178 = arith.mulf %171, %171 : vector<8x32xf32>
    %cst_59 = arith.constant dense<0.000000e+00> : vector<8xf32>
    %179 = vector.multi_reduction <add>, %178, %cst_59 [1] : vector<8x32xf32> to vector<8xf32>
    %180 = vector.shape_cast %179 : vector<8xf32> to vector<8x1xf32>
    %cst_60 = arith.constant 3.200000e+01 : f32
    %181 = vector.broadcast %cst_60 : f32 to vector<8x1xf32>
    %182 = arith.divf %180, %181 : vector<8x1xf32>
    %183 = arith.mulf %177, %177 : vector<8x1xf32>
    %184 = arith.subf %182, %183 : vector<8x1xf32>
    %185 = vector.broadcast %177 : vector<8x1xf32> to vector<8x32xf32>
    %186 = arith.subf %171, %185 : vector<8x32xf32>
    %cst_61 = arith.constant 9.99999974E-6 : f32
    %187 = vector.broadcast %cst_61 : f32 to vector<8x1xf32>
    %188 = arith.addf %184, %187 : vector<8x1xf32>
    %189 = math.rsqrt %188 : vector<8x1xf32>
    %190 = vector.broadcast %189 : vector<8x1xf32> to vector<8x32xf32>
    %191 = arith.mulf %186, %190 : vector<8x32xf32>
    %192 = vector.broadcast %172 : vector<1x32xf32> to vector<8x32xf32>
    %193 = arith.mulf %191, %192 : vector<8x32xf32>
    %194 = vector.broadcast %173 : vector<1x32xf32> to vector<8x32xf32>
    %195 = arith.addf %193, %194 : vector<8x32xf32>
    %196 = vector.broadcast %170 : f32 to vector<8x32xf32>
    %197 = arith.mulf %196, %195 : vector<8x32xf32>
    %198 = arith.addf %8, %197 : vector<8x32xf32>
    %c0_62 = arith.constant 0 : index
    %c0_63 = arith.constant 0 : index
    %199 = vector.load %arg8[%c0_62, %c0_63] : memref<1x32xf32, #tpu.memory_space<vmem>>, vector<1x32xf32>
    %c0_64 = arith.constant 0 : index
    %c0_65 = arith.constant 0 : index
    %200 = vector.load %arg9[%c0_64, %c0_65] : memref<1x32xf32, #tpu.memory_space<vmem>>, vector<1x32xf32>
    %cst_66 = arith.constant dense<0.000000e+00> : vector<8xf32>
    %201 = vector.multi_reduction <add>, %198, %cst_66 [1] : vector<8x32xf32> to vector<8xf32>
    %202 = vector.shape_cast %201 : vector<8xf32> to vector<8x1xf32>
    %cst_67 = arith.constant 3.200000e+01 : f32
    %203 = vector.broadcast %cst_67 : f32 to vector<8x1xf32>
    %204 = arith.divf %202, %203 : vector<8x1xf32>
    %205 = arith.mulf %198, %198 : vector<8x32xf32>
    %cst_68 = arith.constant dense<0.000000e+00> : vector<8xf32>
    %206 = vector.multi_reduction <add>, %205, %cst_68 [1] : vector<8x32xf32> to vector<8xf32>
    %207 = vector.shape_cast %206 : vector<8xf32> to vector<8x1xf32>
    %cst_69 = arith.constant 3.200000e+01 : f32
    %208 = vector.broadcast %cst_69 : f32 to vector<8x1xf32>
    %209 = arith.divf %207, %208 : vector<8x1xf32>
    %210 = arith.mulf %204, %204 : vector<8x1xf32>
    %211 = arith.subf %209, %210 : vector<8x1xf32>
    %212 = vector.broadcast %204 : vector<8x1xf32> to vector<8x32xf32>
    %213 = arith.subf %198, %212 : vector<8x32xf32>
    %cst_70 = arith.constant 9.99999974E-6 : f32
    %214 = vector.broadcast %cst_70 : f32 to vector<8x1xf32>
    %215 = arith.addf %211, %214 : vector<8x1xf32>
    %216 = math.rsqrt %215 : vector<8x1xf32>
    %217 = vector.broadcast %216 : vector<8x1xf32> to vector<8x32xf32>
    %218 = arith.mulf %213, %217 : vector<8x32xf32>
    %219 = vector.broadcast %199 : vector<1x32xf32> to vector<8x32xf32>
    %220 = arith.mulf %218, %219 : vector<8x32xf32>
    %221 = vector.broadcast %200 : vector<1x32xf32> to vector<8x32xf32>
    %222 = arith.addf %220, %221 : vector<8x32xf32>
    %223 = arith.truncf %222 : vector<8x32xf32> to vector<8x32xbf16>
    %c0_71 = arith.constant 0 : index
    %c0_72 = arith.constant 0 : index
    %224 = vector.load %arg12[%c0_71, %c0_72] : memref<32x128xbf16, #tpu.memory_space<vmem>>, vector<32x128xbf16>
    %cst_73 = arith.constant dense<0.000000e+00> : vector<8x128xf32>
    %225 = tpu.matmul %223, %224, %cst_73 {dimension_numbers = #tpu.dot_dimension_numbers<[1], [0], [0], [1], [0, 0, 1, 1], [], []>} : vector<8x32xbf16>, vector<32x128xbf16>, vector<8x128xf32> -> vector<8x128xf32>
    %c0_74 = arith.constant 0 : index
    %c0_75 = arith.constant 0 : index
    %226 = vector.load %arg13[%c0_74, %c0_75] : memref<1x128xf32, #tpu.memory_space<vmem>>, vector<1x128xf32>
    %227 = vector.broadcast %226 : vector<1x128xf32> to vector<8x128xf32>
    %228 = arith.addf %225, %227 : vector<8x128xf32>
    %cst_76 = arith.constant 0.000000e+00 : f32
    %229 = vector.broadcast %cst_76 : f32 to vector<8x128xf32>
    %230 = arith.maximumf %228, %229 : vector<8x128xf32>
    %231 = arith.truncf %230 : vector<8x128xf32> to vector<8x128xbf16>
    %c0_77 = arith.constant 0 : index
    %c0_78 = arith.constant 0 : index
    %232 = vector.load %arg14[%c0_77, %c0_78] : memref<128x32xbf16, #tpu.memory_space<vmem>>, vector<128x32xbf16>
    %cst_79 = arith.constant dense<0.000000e+00> : vector<8x32xf32>
    %233 = tpu.matmul %231, %232, %cst_79 {dimension_numbers = #tpu.dot_dimension_numbers<[1], [0], [0], [1], [0, 0, 1, 1], [], []>} : vector<8x128xbf16>, vector<128x32xbf16>, vector<8x32xf32> -> vector<8x32xf32>
    %c0_80 = arith.constant 0 : index
    %c0_81 = arith.constant 0 : index
    %234 = vector.load %arg15[%c0_80, %c0_81] : memref<1x32xf32, #tpu.memory_space<vmem>>, vector<1x32xf32>
    %235 = vector.broadcast %234 : vector<1x32xf32> to vector<8x32xf32>
    %236 = arith.addf %233, %235 : vector<8x32xf32>
    %237 = arith.addf %198, %236 : vector<8x32xf32>
    %c0_82 = arith.constant 0 : index
    %c0_83 = arith.constant 0 : index
    %c0_84 = arith.constant 0 : index
    %238 = vector.load %arg16[%c0_82, %c0_83, %c0_84] : memref<1x8x32xf32, #tpu.memory_space<vmem>>, vector<1x8x32xf32>
    %239 = vector.shape_cast %238 : vector<1x8x32xf32> to vector<8x32xf32>
    %240 = vector.shape_cast %237 : vector<8x32xf32> to vector<1x8x32xf32>
    tpu.vector_store %arg16[%c0_82, %c0_83, %c0_84], %240 {strides = array<i32>} : memref<1x8x32xf32, #tpu.memory_space<vmem>>, vector<1x8x32xf32>,
    return
  }
  func.func @transform_0(%arg0: i32, %arg1: i32) -> (i32, i32) {
    %c0_i32 = arith.constant 0 : i32
    %c0_i32_0 = arith.constant 0 : i32
    %c0_i32_1 = arith.constant 0 : i32
    return %c0_i32, %c0_i32_0 : i32, i32
  }
  func.func @transform_1(%arg0: i32, %arg1: i32) -> (i32, i32, i32) {
    %c0_i32 = arith.constant 0 : i32
    %c0_i32_0 = arith.constant 0 : i32
    %c0_i32_1 = arith.constant 0 : i32
    return %arg0, %c0_i32, %c0_i32_0 : i32, i32, i32
  }
  func.func @transform_2(%arg0: i32, %arg1: i32) -> (i32, i32) {
    %c0_i32 = arith.constant 0 : i32
    %c0_i32_0 = arith.constant 0 : i32
    %c0_i32_1 = arith.constant 0 : i32
    return %c0_i32, %c0_i32_0 : i32, i32
  }
  func.func @transform_3(%arg0: i32, %arg1: i32) -> (i32, i32) {
    %c0_i32 = arith.constant 0 : i32
    %c0_i32_0 = arith.constant 0 : i32
    %c0_i32_1 = arith.constant 0 : i32
    return %c0_i32, %c0_i32_0 : i32, i32
  }
  func.func @transform_4(%arg0: i32, %arg1: i32) -> (i32, i32) {
    %c0_i32 = arith.constant 0 : i32
    %c0_i32_0 = arith.constant 0 : i32
    %c0_i32_1 = arith.constant 0 : i32
    return %c0_i32, %c0_i32_0 : i32, i32
  }
  func.func @transform_5(%arg0: i32, %arg1: i32) -> (i32, i32) {
    %c0_i32 = arith.constant 0 : i32
    %c0_i32_0 = arith.constant 0 : i32
    %c0_i32_1 = arith.constant 0 : i32
    return %c0_i32, %c0_i32_0 : i32, i32
  }
  func.func @transform_6(%arg0: i32, %arg1: i32) -> (i32, i32) {
    %c0_i32 = arith.constant 0 : i32
    %c0_i32_0 = arith.constant 0 : i32
    %c0_i32_1 = arith.constant 0 : i32
    return %c0_i32, %c0_i32_0 : i32, i32
  }
  func.func @transform_7(%arg0: i32, %arg1: i32) -> (i32, i32) {
    %c0_i32 = arith.constant 0 : i32
    %c0_i32_0 = arith.constant 0 : i32
    %c0_i32_1 = arith.constant 0 : i32
    return %c0_i32, %c0_i32_0 : i32, i32
  }
  func.func @transform_8(%arg0: i32, %arg1: i32) -> (i32, i32) {
    %c0_i32 = arith.constant 0 : i32
    %c0_i32_0 = arith.constant 0 : i32
    %c0_i32_1 = arith.constant 0 : i32
    return %c0_i32, %c0_i32_0 : i32, i32
  }
  func.func @transform_9(%arg0: i32, %arg1: i32) -> (i32, i32) {
    %c0_i32 = arith.constant 0 : i32
    %c0_i32_0 = arith.constant 0 : i32
    %c0_i32_1 = arith.constant 0 : i32
    return %c0_i32, %c0_i32_0 : i32, i32
  }
  func.func @transform_10(%arg0: i32, %arg1: i32) -> (i32, i32) {
    %c0_i32 = arith.constant 0 : i32
    %c0_i32_0 = arith.constant 0 : i32
    %c0_i32_1 = arith.constant 0 : i32
    return %c0_i32, %c0_i32_0 : i32, i32
  }
  func.func @transform_11(%arg0: i32, %arg1: i32) -> (i32, i32) {
    %c0_i32 = arith.constant 0 : i32
    %c0_i32_0 = arith.constant 0 : i32
    %c0_i32_1 = arith.constant 0 : i32
    return %c0_i32, %c0_i32_0 : i32, i32
  }
  func.func @transform_12(%arg0: i32, %arg1: i32) -> (i32, i32) {
    %c0_i32 = arith.constant 0 : i32
    %c0_i32_0 = arith.constant 0 : i32
    %c0_i32_1 = arith.constant 0 : i32
    return %c0_i32, %c0_i32_0 : i32, i32
  }
  func.func @transform_13(%arg0: i32, %arg1: i32) -> (i32, i32) {
    %c0_i32 = arith.constant 0 : i32
    %c0_i32_0 = arith.constant 0 : i32
    %c0_i32_1 = arith.constant 0 : i32
    return %c0_i32, %c0_i32_0 : i32, i32
  }
  func.func @transform_14(%arg0: i32, %arg1: i32) -> (i32, i32, i32) {
    %c0_i32 = arith.constant 0 : i32
    %c0_i32_0 = arith.constant 0 : i32
    return %arg0, %arg1, %c0_i32 : i32, i32, i32
  }
}

</mosaic_0001>

<llo_original>
// kernel: tpu_custom_call.1
$region0: #{tpu_custom_call.1}
  #allocation0 [shape = 'u32[]', space=smem, size = 0x4, offset = 0x4, fixed_abs, tag = 'smem constant byte address 0x4 - core index']
  #allocation1 [shape = 'u32[144,128]{1,0:T(1,128)}', space=vmem, size = 0x12000, scoped, tag = 'internal scratch']
  #allocation2 [shape = 'bf16[8,96]{1,0:T(8,128)(2,1)}', space=vmem, size = 0x800, scoped, tag = 'scratch operand']
  #allocation3 [shape = 'f32[8,32]{1,0:T(8,128)}', space=vmem, size = 0x1000, scoped, tag = 'scratch operand']
  #allocation4 [shape = 'f32[1,1]{1,0:T(1,128)S(6)}', space=smem, size = 0x200, scoped, tag = 'scoped memory for tpu_custom_call.1']
  %s0 = inlined_call_operand.<no memory space> [shape: f32[1,1], index: 0, kind: input, shape index: {}]
  %s1 = inlined_call_operand.hbm [shape: f32[2,8,32], index: 1, kind: input, shape index: {}]
  %s2 = inlined_call_operand.hbm [shape: bf16[32,64], index: 2, kind: input, shape index: {}]
  %s3 = inlined_call_operand.hbm [shape: bf16[32,96], index: 3, kind: input, shape index: {}]
  %s4 = inlined_call_operand.hbm [shape: f32[1,32], index: 4, kind: input, shape index: {}]
  %s5 = inlined_call_operand.hbm [shape: f32[1,32], index: 5, kind: input, shape index: {}]
  %s6 = inlined_call_operand.hbm [shape: f32[1,32], index: 6, kind: input, shape index: {}]
  %s7 = inlined_call_operand.hbm [shape: f32[1,32], index: 7, kind: input, shape index: {}]
  %s8 = inlined_call_operand.hbm [shape: f32[1,32], index: 8, kind: input, shape index: {}]
  %s9 = inlined_call_operand.hbm [shape: f32[1,32], index: 9, kind: input, shape index: {}]
  %s10 = inlined_call_operand.hbm [shape: bf16[32,128], index: 10, kind: input, shape index: {}]
  %s11 = inlined_call_operand.hbm [shape: f32[1,128], index: 11, kind: input, shape index: {}]
  %s12 = inlined_call_operand.hbm [shape: bf16[128,32], index: 12, kind: input, shape index: {}]
  %s13 = inlined_call_operand.hbm [shape: f32[1,32], index: 13, kind: input, shape index: {}]
  %s14 = inlined_call_operand.hbm [shape: f32[2,8,32], index: 14, kind: output, shape index: {}]
  %s15 = sld [smem:[#allocation0]]
  $region145: #{tpu_custom_call.1} parent=0
    _
  %s17 = ssub.s32 1, %s15
  %s18 = scalar_select 0, %s17, %s15
  %19 = sst [smem:[#allocation4]] %s0
  $region1: #{tpu_custom_call.1} parent=0
    #allocation5 [shape = 'u8[8192]{0}', space=vmem, size = 0x2000, scoped, tag = 'input window, operand 1']
    #allocation6 [shape = 's32[2]{0}', space=sflag, size = 0x8, scoped, tag = 'scoped memory for tpu_custom_call.1']
    #allocation7 [shape = 's32[2]{0}', space=sflag, size = 0x8, scoped, tag = 'scoped memory for tpu_custom_call.1']
    #allocation8 [shape = 'u8[8192]{0}', space=vmem, size = 0x2000, scoped, tag = 'input window, operand 2, single buffered']
    #allocation9 [shape = 's32[1]{0}', space=sflag, size = 0x4, scoped, tag = 'scoped memory for tpu_custom_call.1']
    #allocation10 [shape = 'u8[8192]{0}', space=vmem, size = 0x2000, scoped, tag = 'input window, operand 3, single buffered']
    #allocation11 [shape = 'u8[512]{0}', space=vmem, size = 0x400, scoped, tag = 'input window, operand 4, single buffered']
    #allocation12 [shape = 's32[1]{0}', space=sflag, size = 0x4, scoped, tag = 'scoped memory for tpu_custom_call.1']
    #allocation13 [shape = 'u8[512]{0}', space=vmem, size = 0x400, scoped, tag = 'input window, operand 5, single buffered']
    #allocation14 [shape = 'u8[512]{0}', space=vmem, size = 0x400, scoped, tag = 'input window, operand 6, single buffered']
    #allocation15 [shape = 's32[1]{0}', space=sflag, size = 0x4, scoped, tag = 'scoped memory for tpu_custom_call.1']
    #allocation16 [shape = 'u8[512]{0}', space=vmem, size = 0x400, scoped, tag = 'input window, operand 7, single buffered']
    #allocation17 [shape = 'u8[512]{0}', space=vmem, size = 0x400, scoped, tag = 'input window, operand 8, single buffered']
    #allocation18 [shape = 's32[1]{0}', space=sflag, size = 0x4, scoped, tag = 'scoped memory for tpu_custom_call.1']
    #allocation19 [shape = 'u8[512]{0}', space=vmem, size = 0x400, scoped, tag = 'input window, operand 9, single buffered']
    #allocation20 [shape = 'u8[8192]{0}', space=vmem, size = 0x2000, scoped, tag = 'input window, operand 10, single buffered']
    #allocation21 [shape = 's32[1]{0}', space=sflag, size = 0x4, scoped, tag = 'scoped memory for tpu_custom_call.1']
    #allocation22 [shape = 'u8[512]{0}', space=vmem, size = 0x400, scoped, tag = 'input window, operand 11, single buffered']
    #allocation23 [shape = 'u8[32768]{0}', space=vmem, size = 0x8000, scoped, tag = 'input window, operand 12, single buffered']
    #allocation24 [shape = 's32[1]{0}', space=sflag, size = 0x4, scoped, tag = 'scoped memory for tpu_custom_call.1']
    #allocation25 [shape = 'u8[512]{0}', space=vmem, size = 0x400, scoped, tag = 'input window, operand 13, single buffered']
    #allocation26 [shape = 'u8[8192]{0}', space=vmem, size = 0x2000, scoped, tag = 'output window, operand 0']
    %20 = vsyncpa [#allocation6], 0
    %s21 = scalar_lea.sflag [#allocation6], 1
    %22 = vsyncpa %s21, 0
    %23 = vsyncpa [#allocation9], 0
    %24 = vsyncpa [#allocation12], 0
    %25 = vsyncpa [#allocation15], 0
    %26 = vsyncpa [#allocation18], 0
    %27 = vsyncpa [#allocation21], 0
    %28 = vsyncpa [#allocation24], 0
    %29 = vsyncpa [#allocation7], 0
    %s30 = scalar_lea.sflag [#allocation7], 1
    %31 = vsyncpa %s30, 0
    loop: start=0, step=1, limit=4
    $region2: #{tpu_custom_call.1} parent=1 // loop_pre_header
      _
    $region3: #{tpu_custom_call.1} parent=1 // loop_header
      %s33 = sphi 0, %s37
      %p34 = scmp.ge.s32.totalorder %s33, 4
      %s40 = sphi 0, %s52
      %s41 = sphi 0, %s48
      %s42 = sphi 0, %s40
      %s43 = sphi 0, %s41
      %s44 = sphi 0, %s42
      %s45 = sphi 0, %s43
      %s53 = sphi 0, %s53
      %s55 = sphi 0, %s53
      %s56 = sphi 0, %s55
      %s70 = sphi 0, %s56
      %s76 = sphi 0, %s78
      %s79 = sphi 0, %s76
      %s80 = sphi 0, %s79
      %s96 = sphi 0, %s80
      %s100 = sphi 0, %s100
      %s102 = sphi 0, %s100
      %s103 = sphi 0, %s102
      %s117 = sphi 0, %s103
      %s121 = sphi 0, %s121
      %s123 = sphi 0, %s121
      %s124 = sphi 0, %s123
      %s138 = sphi 0, %s124
      %s142 = sphi 0, %s142
      %s144 = sphi 0, %s142
      %s145 = sphi 0, %s144
      %s159 = sphi 0, %s145
      %s163 = sphi 0, %s163
      %s165 = sphi 0, %s163
      %s166 = sphi 0, %s165
      %s180 = sphi 0, %s166
      %s184 = sphi 0, %s184
      %s186 = sphi 0, %s184
      %s187 = sphi 0, %s186
      %s201 = sphi 0, %s187
      %s205 = sphi 0, %s205
      %s207 = sphi 0, %s205
      %s208 = sphi 0, %s207
      %s222 = sphi 0, %s208
      %s226 = sphi 0, %s226
      %s228 = sphi 0, %s226
      %s229 = sphi 0, %s228
      %s243 = sphi 0, %s229
      %s247 = sphi 0, %s247
      %s249 = sphi 0, %s247
      %s250 = sphi 0, %s249
      %s264 = sphi 0, %s250
      %s268 = sphi 0, %s268
      %s270 = sphi 0, %s268
      %s271 = sphi 0, %s270
      %s285 = sphi 0, %s271
      %s289 = sphi 0, %s289
      %s291 = sphi 0, %s289
      %s292 = sphi 0, %s291
      %s306 = sphi 0, %s292
      %s310 = sphi 0, %s310
      %s312 = sphi 0, %s310
      %s313 = sphi 0, %s312
      %s327 = sphi 0, %s313
      %s331 = sphi 0, %s331
      %s333 = sphi 0, %s331
      %s334 = sphi 0, %s333
      %s348 = sphi 0, %s334
      %s356 = sphi 0, %s358
      %s359 = sphi 0, %s356
      %s360 = sphi 0, %s359
      %s376 = sphi 0, %s360
    $region4: #{tpu_custom_call.1} parent=1 // loop_header_branch
      %36 = sbr.rel (%p34) target = $region8
    $region5: #{tpu_custom_call.1} parent=1 // loop_body
      %s38 = ssub.s32 %s33, 1
      %s39 = ssub.s32 %s33, 2
      %s46 = sadd.s32 1, %s41
      %p47 = scmp.ge.s32.totalorder %s46, 1
      %s48 = scalar_select %p47, 0, %s46
      %s49 = sadd.s32 1, %s40
      %s50 = scalar_select %p47, %s49, %s40
      %p51 = scmp.ge.s32.totalorder %s50, 2
      %s52 = scalar_select %p51, 0, %s50
      %s54 = sadd.s32 %s53, 1
      %p57 = scmp.eq.s32.totalorder %s33, 1
      %p58 = scmp.ne.s32.totalorder %s53, %s55
      %p59 = scmp.eq.s32.totalorder %s33, 0
      %p60 = por %p58, %p59
      %p61 = scmp.ne.s32.totalorder %s53, %s55
      %p62 = scmp.eq.s32.totalorder %s38, 1
      %p63 = por %p61, %p62
      %p64 = scmp.ne.s32.totalorder %s55, %s56
      %p65 = scmp.eq.s32.totalorder %s38, 0
      %p66 = por %p64, %p65
      %p67 = scmp.ne.s32.totalorder %s55, %s56
      %p68 = scmp.eq.s32.totalorder %s39, 1
      %p69 = por %p67, %p68
      %p71 = scmp.ne.s32.totalorder %s56, %s70
      %p72 = scmp.eq.s32.totalorder %s39, 0
      %p73 = por %p71, %p72
      %s74 = ssub.s32 %s40, %s52
      %p75 = scmp.eq.s32.totalorder %s74, 0
      %s77 = sadd.s32 %s76, 1
      %s78 = scalar_select %p75, %s76, %s77
      %p81 = pneg %p75
      %p82 = scmp.eq.s32.totalorder %s33, 1
      %p83 = por %p81, %p82
      %p84 = scmp.ne.s32.totalorder %s76, %s79
      %p85 = scmp.eq.s32.totalorder %s33, 0
      %p86 = por %p84, %p85
      %p87 = scmp.ne.s32.totalorder %s76, %s79
      %p88 = scmp.eq.s32.totalorder %s38, 1
      %p89 = por %p87, %p88
      %p90 = scmp.ne.s32.totalorder %s79, %s80
      %p91 = scmp.eq.s32.totalorder %s38, 0
      %p92 = por %p90, %p91
      %p93 = scmp.ne.s32.totalorder %s79, %s80
      %p94 = scmp.eq.s32.totalorder %s39, 1
      %p95 = por %p93, %p94
      %p97 = scmp.ne.s32.totalorder %s80, %s96
      %p98 = scmp.eq.s32.totalorder %s39, 0
      %p99 = por %p97, %p98
      %s101 = sadd.s32 %s100, 1
      %p104 = scmp.eq.s32.totalorder %s33, 1
      %p105 = scmp.ne.s32.totalorder %s100, %s102
      %p106 = scmp.eq.s32.totalorder %s33, 0
      %p107 = por %p105, %p106
      %p108 = scmp.ne.s32.totalorder %s100, %s102
      %p109 = scmp.eq.s32.totalorder %s38, 1
      %p110 = por %p108, %p109
      %p111 = scmp.ne.s32.totalorder %s102, %s103
      %p112 = scmp.eq.s32.totalorder %s38, 0
      %p113 = por %p111, %p112
      %p114 = scmp.ne.s32.totalorder %s102, %s103
      %p115 = scmp.eq.s32.totalorder %s39, 1
      %p116 = por %p114, %p115
      %p118 = scmp.ne.s32.totalorder %s103, %s117
      %p119 = scmp.eq.s32.totalorder %s39, 0
      %p120 = por %p118, %p119
      %s122 = sadd.s32 %s121, 1
      %p125 = scmp.eq.s32.totalorder %s33, 1
      %p126 = scmp.ne.s32.totalorder %s121, %s123
      %p127 = scmp.eq.s32.totalorder %s33, 0
      %p128 = por %p126, %p127
      %p129 = scmp.ne.s32.totalorder %s121, %s123
      %p130 = scmp.eq.s32.totalorder %s38, 1
      %p131 = por %p129, %p130
      %p132 = scmp.ne.s32.totalorder %s123, %s124
      %p133 = scmp.eq.s32.totalorder %s38, 0
      %p134 = por %p132, %p133
      %p135 = scmp.ne.s32.totalorder %s123, %s124
      %p136 = scmp.eq.s32.totalorder %s39, 1
      %p137 = por %p135, %p136
      %p139 = scmp.ne.s32.totalorder %s124, %s138
      %p140 = scmp.eq.s32.totalorder %s39, 0
      %p141 = por %p139, %p140
      %s143 = sadd.s32 %s142, 1
      %p146 = scmp.eq.s32.totalorder %s33, 1
      %p147 = scmp.ne.s32.totalorder %s142, %s144
      %p148 = scmp.eq.s32.totalorder %s33, 0
      %p149 = por %p147, %p148
      %p150 = scmp.ne.s32.totalorder %s142, %s144
      %p151 = scmp.eq.s32.totalorder %s38, 1
      %p152 = por %p150, %p151
      %p153 = scmp.ne.s32.totalorder %s144, %s145
      %p154 = scmp.eq.s32.totalorder %s38, 0
      %p155 = por %p153, %p154
      %p156 = scmp.ne.s32.totalorder %s144, %s145
      %p157 = scmp.eq.s32.totalorder %s39, 1
      %p158 = por %p156, %p157
      %p160 = scmp.ne.s32.totalorder %s145, %s159
      %p161 = scmp.eq.s32.totalorder %s39, 0
      %p162 = por %p160, %p161
      %s164 = sadd.s32 %s163, 1
      %p167 = scmp.eq.s32.totalorder %s33, 1
      %p168 = scmp.ne.s32.totalorder %s163, %s165
      %p169 = scmp.eq.s32.totalorder %s33, 0
      %p170 = por %p168, %p169
      %p171 = scmp.ne.s32.totalorder %s163, %s165
      %p172 = scmp.eq.s32.totalorder %s38, 1
      %p173 = por %p171, %p172
      %p174 = scmp.ne.s32.totalorder %s165, %s166
      %p175 = scmp.eq.s32.totalorder %s38, 0
      %p176 = por %p174, %p175
      %p177 = scmp.ne.s32.totalorder %s165, %s166
      %p178 = scmp.eq.s32.totalorder %s39, 1
      %p179 = por %p177, %p178
      %p181 = scmp.ne.s32.totalorder %s166, %s180
      %p182 = scmp.eq.s32.totalorder %s39, 0
      %p183 = por %p181, %p182
      %s185 = sadd.s32 %s184, 1
      %p188 = scmp.eq.s32.totalorder %s33, 1
      %p189 = scmp.ne.s32.totalorder %s184, %s186
      %p190 = scmp.eq.s32.totalorder %s33, 0
      %p191 = por %p189, %p190
      %p192 = scmp.ne.s32.totalorder %s184, %s186
      %p193 = scmp.eq.s32.totalorder %s38, 1
      %p194 = por %p192, %p193
      %p195 = scmp.ne.s32.totalorder %s186, %s187
      %p196 = scmp.eq.s32.totalorder %s38, 0
      %p197 = por %p195, %p196
      %p198 = scmp.ne.s32.totalorder %s186, %s187
      %p199 = scmp.eq.s32.totalorder %s39, 1
      %p200 = por %p198, %p199
      %p202 = scmp.ne.s32.totalorder %s187, %s201
      %p203 = scmp.eq.s32.totalorder %s39, 0
      %p204 = por %p202, %p203
      %s206 = sadd.s32 %s205, 1
      %p209 = scmp.eq.s32.totalorder %s33, 1
      %p210 = scmp.ne.s32.totalorder %s205, %s207
      %p211 = scmp.eq.s32.totalorder %s33, 0
      %p212 = por %p210, %p211
      %p213 = scmp.ne.s32.totalorder %s205, %s207
      %p214 = scmp.eq.s32.totalorder %s38, 1
      %p215 = por %p213, %p214
      %p216 = scmp.ne.s32.totalorder %s207, %s208
      %p217 = scmp.eq.s32.totalorder %s38, 0
      %p218 = por %p216, %p217
      %p219 = scmp.ne.s32.totalorder %s207, %s208
      %p220 = scmp.eq.s32.totalorder %s39, 1
      %p221 = por %p219, %p220
      %p223 = scmp.ne.s32.totalorder %s208, %s222
      %p224 = scmp.eq.s32.totalorder %s39, 0
      %p225 = por %p223, %p224
      %s227 = sadd.s32 %s226, 1
      %p230 = scmp.eq.s32.totalorder %s33, 1
      %p231 = scmp.ne.s32.totalorder %s226, %s228
      %p232 = scmp.eq.s32.totalorder %s33, 0
      %p233 = por %p231, %p232
      %p234 = scmp.ne.s32.totalorder %s226, %s228
      %p235 = scmp.eq.s32.totalorder %s38, 1
      %p236 = por %p234, %p235
      %p237 = scmp.ne.s32.totalorder %s228, %s229
      %p238 = scmp.eq.s32.totalorder %s38, 0
      %p239 = por %p237, %p238
      %p240 = scmp.ne.s32.totalorder %s228, %s229
      %p241 = scmp.eq.s32.totalorder %s39, 1
      %p242 = por %p240, %p241
      %p244 = scmp.ne.s32.totalorder %s229, %s243
      %p245 = scmp.eq.s32.totalorder %s39, 0
      %p246 = por %p244, %p245
      %s248 = sadd.s32 %s247, 1
      %p251 = scmp.eq.s32.totalorder %s33, 1
      %p252 = scmp.ne.s32.totalorder %s247, %s249
      %p253 = scmp.eq.s32.totalorder %s33, 0
      %p254 = por %p252, %p253
      %p255 = scmp.ne.s32.totalorder %s247, %s249
      %p256 = scmp.eq.s32.totalorder %s38, 1
      %p257 = por %p255, %p256
      %p258 = scmp.ne.s32.totalorder %s249, %s250
      %p259 = scmp.eq.s32.totalorder %s38, 0
      %p260 = por %p258, %p259
      %p261 = scmp.ne.s32.totalorder %s249, %s250
      %p262 = scmp.eq.s32.totalorder %s39, 1
      %p263 = por %p261, %p262
      %p265 = scmp.ne.s32.totalorder %s250, %s264
      %p266 = scmp.eq.s32.totalorder %s39, 0
      %p267 = por %p265, %p266
      %s269 = sadd.s32 %s268, 1
      %p272 = scmp.eq.s32.totalorder %s33, 1
      %p273 = scmp.ne.s32.totalorder %s268, %s270
      %p274 = scmp.eq.s32.totalorder %s33, 0
      %p275 = por %p273, %p274
      %p276 = scmp.ne.s32.totalorder %s268, %s270
      %p277 = scmp.eq.s32.totalorder %s38, 1
      %p278 = por %p276, %p277
      %p279 = scmp.ne.s32.totalorder %s270, %s271
      %p280 = scmp.eq.s32.totalorder %s38, 0
      %p281 = por %p279, %p280
      %p282 = scmp.ne.s32.totalorder %s270, %s271
      %p283 = scmp.eq.s32.totalorder %s39, 1
      %p284 = por %p282, %p283
      %p286 = scmp.ne.s32.totalorder %s271, %s285
      %p287 = scmp.eq.s32.totalorder %s39, 0
      %p288 = por %p286, %p287
      %s290 = sadd.s32 %s289, 1
      %p293 = scmp.eq.s32.totalorder %s33, 1
      %p294 = scmp.ne.s32.totalorder %s289, %s291
      %p295 = scmp.eq.s32.totalorder %s33, 0
      %p296 = por %p294, %p295
      %p297 = scmp.ne.s32.totalorder %s289, %s291
      %p298 = scmp.eq.s32.totalorder %s38, 1
      %p299 = por %p297, %p298
      %p300 = scmp.ne.s32.totalorder %s291, %s292
      %p301 = scmp.eq.s32.totalorder %s38, 0
      %p302 = por %p300, %p301
      %p303 = scmp.ne.s32.totalorder %s291, %s292
      %p304 = scmp.eq.s32.totalorder %s39, 1
      %p305 = por %p303, %p304
      %p307 = scmp.ne.s32.totalorder %s292, %s306
      %p308 = scmp.eq.s32.totalorder %s39, 0
      %p309 = por %p307, %p308
      %s311 = sadd.s32 %s310, 1
      %p314 = scmp.eq.s32.totalorder %s33, 1
      %p315 = scmp.ne.s32.totalorder %s310, %s312
      %p316 = scmp.eq.s32.totalorder %s33, 0
      %p317 = por %p315, %p316
      %p318 = scmp.ne.s32.totalorder %s310, %s312
      %p319 = scmp.eq.s32.totalorder %s38, 1
      %p320 = por %p318, %p319
      %p321 = scmp.ne.s32.totalorder %s312, %s313
      %p322 = scmp.eq.s32.totalorder %s38, 0
      %p323 = por %p321, %p322
      %p324 = scmp.ne.s32.totalorder %s312, %s313
      %p325 = scmp.eq.s32.totalorder %s39, 1
      %p326 = por %p324, %p325
      %p328 = scmp.ne.s32.totalorder %s313, %s327
      %p329 = scmp.eq.s32.totalorder %s39, 0
      %p330 = por %p328, %p329
      %s332 = sadd.s32 %s331, 1
      %p335 = scmp.eq.s32.totalorder %s33, 1
      %p336 = scmp.ne.s32.totalorder %s331, %s333
      %p337 = scmp.eq.s32.totalorder %s33, 0
      %p338 = por %p336, %p337
      %p339 = scmp.ne.s32.totalorder %s331, %s333
      %p340 = scmp.eq.s32.totalorder %s38, 1
      %p341 = por %p339, %p340
      %p342 = scmp.ne.s32.totalorder %s333, %s334
      %p343 = scmp.eq.s32.totalorder %s38, 0
      %p344 = por %p342, %p343
      %p345 = scmp.ne.s32.totalorder %s333, %s334
      %p346 = scmp.eq.s32.totalorder %s39, 1
      %p347 = por %p345, %p346
      %p349 = scmp.ne.s32.totalorder %s334, %s348
      %p350 = scmp.eq.s32.totalorder %s39, 0
      %p351 = por %p349, %p350
      %s352 = ssub.s32 %s40, %s52
      %s353 = ssub.s32 %s41, %s48
      %s354 = sor.u32 %s352, %s353
      %p355 = scmp.eq.s32.totalorder %s354, 0
      %s357 = sadd.s32 %s356, 1
      %s358 = scalar_select %p355, %s356, %s357
      %p361 = pneg %p355
      %p362 = scmp.eq.s32.totalorder %s33, 1
      %p363 = por %p361, %p362
      %p364 = scmp.ne.s32.totalorder %s356, %s359
      %p365 = scmp.eq.s32.totalorder %s33, 0
      %p366 = por %p364, %p365
      %p367 = scmp.ne.s32.totalorder %s356, %s359
      %p368 = scmp.eq.s32.totalorder %s38, 1
      %p369 = por %p367, %p368
      %p370 = scmp.ne.s32.totalorder %s359, %s360
      %p371 = scmp.eq.s32.totalorder %s38, 0
      %p372 = por %p370, %p371
      %p373 = scmp.ne.s32.totalorder %s359, %s360
      %p374 = scmp.eq.s32.totalorder %s39, 1
      %p375 = por %p373, %p374
      %p377 = scmp.ne.s32.totalorder %s360, %s376
      %p378 = scmp.eq.s32.totalorder %s39, 0
      %p379 = por %p377, %p378
      %p380 = scmp.le.s32.totalorder 1, %s33
      %p381 = scmp.lt.s32.totalorder %s33, 3
      %p382 = pnand %p380, %p381
      %p383 = pneg %p382
      // Predicated region
      $region9: #{tpu_custom_call.1} parent=5 // pred_check
        _
      $region10: #{tpu_custom_call.1} parent=5 // pred_check_branch
        %385 = sbr.rel (%p382) target = $region12
      $region11: #{tpu_custom_call.1} parent=5 // pred_region
        %s386 = ssub.s32 %s33, 1
        // Predicated region
        $region13: #{tpu_custom_call.1} parent=11 // pred_check
          %p387 = pneg %p66
        $region14: #{tpu_custom_call.1} parent=11 // pred_check_branch
          %389 = sbr.rel (%p387) target = $region16
        $region15: #{tpu_custom_call.1} parent=11 // pred_region
          _
        $region16: #{tpu_custom_call.1} parent=11 // pred_fallthru
          _
        // Predicated region
        $region17: #{tpu_custom_call.1} parent=11 // pred_check
          %p390 = pneg %p113
        $region18: #{tpu_custom_call.1} parent=11 // pred_check_branch
          %392 = sbr.rel (%p390) target = $region20
        $region19: #{tpu_custom_call.1} parent=11 // pred_region
          %s394 = ssub.s32 256, 256
          %395 = vsyncadd [#allocation9], %s394
          %s396 = sshll.u32 [#allocation8], 4
          %s397 = int_to_ptr.vmem [resolvable:$true] %s396
          %402 = dma.hbm_to_vmem [thread:$0]  %s2, 256, %s397, [#allocation9], 64, 64, 4
        $region20: #{tpu_custom_call.1} parent=11 // pred_fallthru
          _
        // Predicated region
        $region21: #{tpu_custom_call.1} parent=11 // pred_check
          %p403 = pneg %p134
        $region22: #{tpu_custom_call.1} parent=11 // pred_check_branch
          %405 = sbr.rel (%p403) target = $region24
        $region23: #{tpu_custom_call.1} parent=11 // pred_region
          %s407 = ssub.s32 256, 256
          %408 = vsyncadd [#allocation9], %s407
          %s409 = sshll.u32 [#allocation10], 4
          %s410 = int_to_ptr.vmem [resolvable:$true] %s409
          %415 = dma.hbm_to_vmem [thread:$0]  %s3, 256, %s410, [#allocation9], 64, 64, 4
        $region24: #{tpu_custom_call.1} parent=11 // pred_fallthru
          _
        // Predicated region
        $region25: #{tpu_custom_call.1} parent=11 // pred_check
          %p416 = pneg %p155
        $region26: #{tpu_custom_call.1} parent=11 // pred_check_branch
          %418 = sbr.rel (%p416) target = $region28
        $region27: #{tpu_custom_call.1} parent=11 // pred_region
          %s420 = ssub.s32 16, 16
          %421 = vsyncadd [#allocation12], %s420
          %s423 = sshll.u32 [#allocation11], 4
          %s424 = int_to_ptr.vmem [resolvable:$true] %s423
          %426 = dma.hbm_to_vmem [thread:$0]  %s4, 16, %s424, [#allocation12]
        $region28: #{tpu_custom_call.1} parent=11 // pred_fallthru
          _
        // Predicated region
        $region29: #{tpu_custom_call.1} parent=11 // pred_check
          %p427 = pneg %p176
        $region30: #{tpu_custom_call.1} parent=11 // pred_check_branch
          %429 = sbr.rel (%p427) target = $region32
        $region31: #{tpu_custom_call.1} parent=11 // pred_region
          %s431 = ssub.s32 16, 16
          %432 = vsyncadd [#allocation12], %s431
          %s434 = sshll.u32 [#allocation13], 4
          %s435 = int_to_ptr.vmem [resolvable:$true] %s434
          %437 = dma.hbm_to_vmem [thread:$0]  %s5, 16, %s435, [#allocation12]
        $region32: #{tpu_custom_call.1} parent=11 // pred_fallthru
          _
        // Predicated region
        $region33: #{tpu_custom_call.1} parent=11 // pred_check
          %p438 = pneg %p197
        $region34: #{tpu_custom_call.1} parent=11 // pred_check_branch
          %440 = sbr.rel (%p438) target = $region36
        $region35: #{tpu_custom_call.1} parent=11 // pred_region
          %s442 = ssub.s32 16, 16
          %443 = vsyncadd [#allocation15], %s442
          %s445 = sshll.u32 [#allocation14], 4
          %s446 = int_to_ptr.vmem [resolvable:$true] %s445
          %448 = dma.hbm_to_vmem [thread:$0]  %s6, 16, %s446, [#allocation15]
        $region36: #{tpu_custom_call.1} parent=11 // pred_fallthru
          _
        // Predicated region
        $region37: #{tpu_custom_call.1} parent=11 // pred_check
          %p449 = pneg %p218
        $region38: #{tpu_custom_call.1} parent=11 // pred_check_branch
          %451 = sbr.rel (%p449) target = $region40
        $region39: #{tpu_custom_call.1} parent=11 // pred_region
          %s453 = ssub.s32 16, 16
          %454 = vsyncadd [#allocation15], %s453
          %s456 = sshll.u32 [#allocation16], 4
          %s457 = int_to_ptr.vmem [resolvable:$true] %s456
          %459 = dma.hbm_to_vmem [thread:$0]  %s7, 16, %s457, [#allocation15]
        $region40: #{tpu_custom_call.1} parent=11 // pred_fallthru
          _
        // Predicated region
        $region41: #{tpu_custom_call.1} parent=11 // pred_check
          %p460 = pneg %p239
        $region42: #{tpu_custom_call.1} parent=11 // pred_check_branch
          %462 = sbr.rel (%p460) target = $region44
        $region43: #{tpu_custom_call.1} parent=11 // pred_region
          %s464 = ssub.s32 16, 16
          %465 = vsyncadd [#allocation18], %s464
          %s467 = sshll.u32 [#allocation17], 4
          %s468 = int_to_ptr.vmem [resolvable:$true] %s467
          %470 = dma.hbm_to_vmem [thread:$0]  %s8, 16, %s468, [#allocation18]
        $region44: #{tpu_custom_call.1} parent=11 // pred_fallthru
          _
        // Predicated region
        $region45: #{tpu_custom_call.1} parent=11 // pred_check
          %p471 = pneg %p260
        $region46: #{tpu_custom_call.1} parent=11 // pred_check_branch
          %473 = sbr.rel (%p471) target = $region48
        $region47: #{tpu_custom_call.1} parent=11 // pred_region
          %s475 = ssub.s32 16, 16
          %476 = vsyncadd [#allocation18], %s475
          %s478 = sshll.u32 [#allocation19], 4
          %s479 = int_to_ptr.vmem [resolvable:$true] %s478
          %481 = dma.hbm_to_vmem [thread:$0]  %s9, 16, %s479, [#allocation18]
        $region48: #{tpu_custom_call.1} parent=11 // pred_fallthru
          _
        // Predicated region
        $region49: #{tpu_custom_call.1} parent=11 // pred_check
          %p482 = pneg %p281
        $region50: #{tpu_custom_call.1} parent=11 // pred_check_branch
          %484 = sbr.rel (%p482) target = $region52
        $region51: #{tpu_custom_call.1} parent=11 // pred_region
          %s486 = ssub.s32 256, 256
          %487 = vsyncadd [#allocation21], %s486
          %s488 = sshll.u32 [#allocation20], 4
          %s489 = int_to_ptr.vmem [resolvable:$true] %s488
          %494 = dma.hbm_to_vmem [thread:$0]  %s10, 256, %s489, [#allocation21], 64, 64, 4
        $region52: #{tpu_custom_call.1} parent=11 // pred_fallthru
          _
        // Predicated region
        $region53: #{tpu_custom_call.1} parent=11 // pred_check
          %p495 = pneg %p302
        $region54: #{tpu_custom_call.1} parent=11 // pred_check_branch
          %497 = sbr.rel (%p495) target = $region56
        $region55: #{tpu_custom_call.1} parent=11 // pred_region
          %s499 = ssub.s32 16, 16
          %500 = vsyncadd [#allocation21], %s499
          %s502 = sshll.u32 [#allocation22], 4
          %s503 = int_to_ptr.vmem [resolvable:$true] %s502
          %505 = dma.hbm_to_vmem [thread:$0]  %s11, 16, %s503, [#allocation21]
        $region56: #{tpu_custom_call.1} parent=11 // pred_fallthru
          _
        // Predicated region
        $region57: #{tpu_custom_call.1} parent=11 // pred_check
          %p506 = pneg %p323
        $region58: #{tpu_custom_call.1} parent=11 // pred_check_branch
          %508 = sbr.rel (%p506) target = $region60
        $region59: #{tpu_custom_call.1} parent=11 // pred_region
          %s510 = ssub.s32 1024, 1024
          %511 = vsyncadd [#allocation24], %s510
          %s512 = sshll.u32 [#allocation23], 4
          %s513 = int_to_ptr.vmem [resolvable:$true] %s512
          %518 = dma.hbm_to_vmem [thread:$0]  %s12, 1024, %s513, [#allocation24], 64, 64, 4
        $region60: #{tpu_custom_call.1} parent=11 // pred_fallthru
          _
        // Predicated region
        $region61: #{tpu_custom_call.1} parent=11 // pred_check
          %p519 = pneg %p344
        $region62: #{tpu_custom_call.1} parent=11 // pred_check_branch
          %521 = sbr.rel (%p519) target = $region64
        $region63: #{tpu_custom_call.1} parent=11 // pred_region
          %s523 = ssub.s32 16, 16
          %524 = vsyncadd [#allocation24], %s523
          %s526 = sshll.u32 [#allocation25], 4
          %s527 = int_to_ptr.vmem [resolvable:$true] %s526
          %529 = dma.hbm_to_vmem [thread:$0]  %s13, 16, %s527, [#allocation24]
        $region64: #{tpu_custom_call.1} parent=11 // pred_fallthru
          _
      $region12: #{tpu_custom_call.1} parent=5 // pred_fallthru
        _
      %p530 = scmp.lt.s32.totalorder %s33, 2
      // Predicated region
      $region65: #{tpu_custom_call.1} parent=5 // pred_check
        %p531 = pneg %p530
      $region66: #{tpu_custom_call.1} parent=5 // pred_check_branch
        %533 = sbr.rel (%p531) target = $region68
      $region67: #{tpu_custom_call.1} parent=5 // pred_region
        // Predicated region
        $region69: #{tpu_custom_call.1} parent=67 // pred_check
          %p534 = pneg %p86
        $region70: #{tpu_custom_call.1} parent=67 // pred_check_branch
          %536 = sbr.rel (%p534) target = $region72
        $region71: #{tpu_custom_call.1} parent=67 // pred_region
          %s537 = sand.u32 %s76, 1
          %s538 = scalar_lea.sflag [#allocation6], %s537
          %s539 = sand.u32 %s76, 1
          %s540 = smul.addr %s539, 8
          %s541 = scalar_lea.vmem [#allocation5], %s540
          %s543 = ssub.s32 128, 128
          %544 = vsyncadd %s538, %s543
          %s545 = smul.addr %s40, 128
          %s546 = scalar_lea.hbm %s1, %s545
          %s548 = sshll.u32 %s541, 4
          %s549 = int_to_ptr.vmem [resolvable:$true] %s548
          %551 = dma.hbm_to_vmem [thread:$0]  %s546, 128, %s549, %s538
        $region72: #{tpu_custom_call.1} parent=67 // pred_fallthru
          _
      $region68: #{tpu_custom_call.1} parent=5 // pred_fallthru
        _
      %p552 = scmp.le.s32.totalorder 1, %s33
      %p553 = scmp.lt.s32.totalorder %s33, 3
      %p554 = pnand %p552, %p553
      %p555 = pneg %p554
      // Predicated region
      $region73: #{tpu_custom_call.1} parent=5 // pred_check
        _
      $region74: #{tpu_custom_call.1} parent=5 // pred_check_branch
        %557 = sbr.rel (%p554) target = $region76
      $region75: #{tpu_custom_call.1} parent=5 // pred_region
        %s558 = ssub.s32 %s33, 1
        %s559 = sand.u32 %s79, 1
        %s560 = scalar_lea.sflag [#allocation6], %s559
        %s561 = sand.u32 %s79, 1
        %s562 = smul.addr %s561, 8
        %s563 = scalar_lea.vmem [#allocation5], %s562
        // Predicated region
        $region77: #{tpu_custom_call.1} parent=75 // pred_check
          %p564 = pneg %p92
        $region78: #{tpu_custom_call.1} parent=75 // pred_check_branch
          %566 = sbr.rel (%p564) target = $region80
        $region79: #{tpu_custom_call.1} parent=75 // pred_region
          %567 = dma.done %s560, 128
        $region80: #{tpu_custom_call.1} parent=75 // pred_fallthru
          _
        // Predicated region
        $region81: #{tpu_custom_call.1} parent=75 // pred_check
          %p568 = pneg %p113
        $region82: #{tpu_custom_call.1} parent=75 // pred_check_branch
          %570 = sbr.rel (%p568) target = $region84
        $region83: #{tpu_custom_call.1} parent=75 // pred_region
          %571 = dma.done [#allocation9], 256
        $region84: #{tpu_custom_call.1} parent=75 // pred_fallthru
          _
        // Predicated region
        $region85: #{tpu_custom_call.1} parent=75 // pred_check
          %p572 = pneg %p134
        $region86: #{tpu_custom_call.1} parent=75 // pred_check_branch
          %574 = sbr.rel (%p572) target = $region88
        $region87: #{tpu_custom_call.1} parent=75 // pred_region
          %575 = dma.done [#allocation9], 256
        $region88: #{tpu_custom_call.1} parent=75 // pred_fallthru
          _
        // Predicated region
        $region89: #{tpu_custom_call.1} parent=75 // pred_check
          %p576 = pneg %p155
        $region90: #{tpu_custom_call.1} parent=75 // pred_check_branch
          %578 = sbr.rel (%p576) target = $region92
        $region91: #{tpu_custom_call.1} parent=75 // pred_region
          %579 = dma.done [#allocation12], 16
        $region92: #{tpu_custom_call.1} parent=75 // pred_fallthru
          _
        // Predicated region
        $region93: #{tpu_custom_call.1} parent=75 // pred_check
          %p580 = pneg %p176
        $region94: #{tpu_custom_call.1} parent=75 // pred_check_branch
          %582 = sbr.rel (%p580) target = $region96
        $region95: #{tpu_custom_call.1} parent=75 // pred_region
          %583 = dma.done [#allocation12], 16
        $region96: #{tpu_custom_call.1} parent=75 // pred_fallthru
          _
        // Predicated region
        $region97: #{tpu_custom_call.1} parent=75 // pred_check
          %p584 = pneg %p197
        $region98: #{tpu_custom_call.1} parent=75 // pred_check_branch
          %586 = sbr.rel (%p584) target = $region100
        $region99: #{tpu_custom_call.1} parent=75 // pred_region
          %587 = dma.done [#allocation15], 16
        $region100: #{tpu_custom_call.1} parent=75 // pred_fallthru
          _
        // Predicated region
        $region101: #{tpu_custom_call.1} parent=75 // pred_check
          %p588 = pneg %p218
        $region102: #{tpu_custom_call.1} parent=75 // pred_check_branch
          %590 = sbr.rel (%p588) target = $region104
        $region103: #{tpu_custom_call.1} parent=75 // pred_region
          %591 = dma.done [#allocation15], 16
        $region104: #{tpu_custom_call.1} parent=75 // pred_fallthru
          _
        // Predicated region
        $region105: #{tpu_custom_call.1} parent=75 // pred_check
          %p592 = pneg %p239
        $region106: #{tpu_custom_call.1} parent=75 // pred_check_branch
          %594 = sbr.rel (%p592) target = $region108
        $region107: #{tpu_custom_call.1} parent=75 // pred_region
          %595 = dma.done [#allocation18], 16
        $region108: #{tpu_custom_call.1} parent=75 // pred_fallthru
          _
        // Predicated region
        $region109: #{tpu_custom_call.1} parent=75 // pred_check
          %p596 = pneg %p260
        $region110: #{tpu_custom_call.1} parent=75 // pred_check_branch
          %598 = sbr.rel (%p596) target = $region112
        $region111: #{tpu_custom_call.1} parent=75 // pred_region
          %599 = dma.done [#allocation18], 16
        $region112: #{tpu_custom_call.1} parent=75 // pred_fallthru
          _
        // Predicated region
        $region113: #{tpu_custom_call.1} parent=75 // pred_check
          %p600 = pneg %p281
        $region114: #{tpu_custom_call.1} parent=75 // pred_check_branch
          %602 = sbr.rel (%p600) target = $region116
        $region115: #{tpu_custom_call.1} parent=75 // pred_region
          %603 = dma.done [#allocation21], 256
        $region116: #{tpu_custom_call.1} parent=75 // pred_fallthru
          _
        // Predicated region
        $region117: #{tpu_custom_call.1} parent=75 // pred_check
          %p604 = pneg %p302
        $region118: #{tpu_custom_call.1} parent=75 // pred_check_branch
          %606 = sbr.rel (%p604) target = $region120
        $region119: #{tpu_custom_call.1} parent=75 // pred_region
          %607 = dma.done [#allocation21], 16
        $region120: #{tpu_custom_call.1} parent=75 // pred_fallthru
          _
        // Predicated region
        $region121: #{tpu_custom_call.1} parent=75 // pred_check
          %p608 = pneg %p323
        $region122: #{tpu_custom_call.1} parent=75 // pred_check_branch
          %610 = sbr.rel (%p608) target = $region124
        $region123: #{tpu_custom_call.1} parent=75 // pred_region
          %611 = dma.done [#allocation24], 1024
        $region124: #{tpu_custom_call.1} parent=75 // pred_fallthru
          _
        // Predicated region
        $region125: #{tpu_custom_call.1} parent=75 // pred_check
          %p612 = pneg %p344
        $region126: #{tpu_custom_call.1} parent=75 // pred_check_branch
          %614 = sbr.rel (%p612) target = $region128
        $region127: #{tpu_custom_call.1} parent=75 // pred_region
          %615 = dma.done [#allocation24], 16
        $region128: #{tpu_custom_call.1} parent=75 // pred_fallthru
          _
        %p616 = pneg %p66
        %p617 = pneg %p63
        %s618 = sand.u32 %s79, 1
        %s619 = scalar_lea.sflag [#allocation6], %s618
        %s620 = sand.u32 %s79, 1
        %s621 = smul.addr %s620, 8
        %s622 = scalar_lea.vmem [#allocation5], %s621
        %p623 = pneg %p92
        %p624 = pneg %p89
        %p625 = pneg %p113
        %p626 = pneg %p110
        %p627 = pneg %p134
        %p628 = pneg %p131
        %p629 = pneg %p155
        %p630 = pneg %p152
        %p631 = pneg %p176
        %p632 = pneg %p173
        %p633 = pneg %p197
        %p634 = pneg %p194
        %p635 = pneg %p218
        %p636 = pneg %p215
        %p637 = pneg %p239
        %p638 = pneg %p236
        %p639 = pneg %p260
        %p640 = pneg %p257
        %p641 = pneg %p281
        %p642 = pneg %p278
        %p643 = pneg %p302
        %p644 = pneg %p299
        %p645 = pneg %p323
        %p646 = pneg %p320
        %p647 = pneg %p344
        %p648 = pneg %p341
        %p649 = pneg %p372
        %p650 = pneg %p369
        %s651 = sand.u32 %s359, 1
        %s652 = scalar_lea.sflag [#allocation7], %s651
        %s653 = sand.u32 %s359, 1
        %s654 = smul.addr %s653, 8
        %s655 = scalar_lea.vmem [#allocation26], %s654
        %s657 = sld [smem:[#allocation4]]
        %p658 = scmp.eq.s32.totalorder %s43, 0
        // Predicated region
        $region129: #{tpu_custom_call.1} parent=75 // pred_check
          %p659 = pneg %p658
        $region130: #{tpu_custom_call.1} parent=75 // pred_check_branch
          %661 = sbr.rel (%p659) target = $region132
        $region131: #{tpu_custom_call.1} parent=75 // pred_region
          %v662 = vld [vmem:[%s563] sm:$0xff]
          %v663 = vld [vmem:[#allocation11] sm:$0x1]
          %v664 = vld [vmem:[#allocation13] sm:$0x1]
          %vm665 = vcmask 261120
          %v666 = vsel %vm665, %v662, 0.0
          %667 = vadd.xlane.f32.xlu0 %v666
          %v668 = vpop.xlane.xlu0 %667
          %v669 = vrcp.pop 32.0
          %v670 = vmul.f32 %v668, %v669
          %v671 = vmul.f32 %v662, %v662
          %v672 = vsel %vm665, %v671, 0.0
          %673 = vadd.xlane.f32.xlu0 %v672
          %v674 = vpop.xlane.xlu0 %673
          %v675 = vmul.f32 %v674, %v669
          %v676 = vmul.f32 %v670, %v670
          %v677 = vsub.f32 %v675, %v676
          %v678 = vsub.f32 %v662, %v670
          %v679 = vadd.f32 %v677, 1e-05
          %v680 = vrsqrt.pop %v679
          %v681 = vmul.f32 %v678, %v680
          %v683 = vlaneseq
          %v684 = vshrl.u32 %v683, 7
          %v685 = vsub.s32 0, %v684
          %v686 = vrot.slane %v663, %v685
          %v688 = vmul.f32 %v681, %v686
          %v690 = vlaneseq
          %v691 = vshrl.u32 %v690, 7
          %v692 = vsub.s32 0, %v691
          %v693 = vrot.slane %v664, %v692
          %v695 = vadd.f32 %v688, %v693
          %v696 = vpack.c.bf16 %v695, %v695
          %v697 = vld [vmem:[#allocation10] sm:$0xf]
          %v698 = vld [vmem:[#allocation10 + $0x4] sm:$0xf]
          %v699 = vld [vmem:[#allocation10 + $0x8] sm:$0xf]
          %v700 = vld [vmem:[#allocation10 + $0xc] sm:$0xf]
          %v705 = vunpack.c.l.b16 %v697
          %v706 = vunpack.c.l.b16 %v698
          %v707 = vunpack.c.l.b16 %v699
          %v708 = vunpack.c.l.b16 %v700
          %v709 = vpack.c.b16 %v706, %v705
          %v710 = vpack.c.b16 %v708, %v707
          %v714 = vsel %vm665, %v696, 0
          %716 = vmatprep.subr.bf16.mxu0 0
          %717 = vmatpush1.bf16.msra.mxu0 %v709
          %718 = vmatprep.subr.bf16.mxu0 0
          %719 = vmatpush1.bf16.msra.mxu0 %v710
          %720 = vmatprep.subr.bf16.mxu0 0
          %721 = vmatpush1.bf16.msra.mxu0 0
          %722 = vmatprep.subr.bf16.mxu0 0
          %723 = vmatpush1.bf16.msra.mxu0 0
          %724 = vmatprep.subr.bf16.mxu0 0
          %725 = vmatpush1.bf16.msra.mxu0 0
          %726 = vmatprep.subr.bf16.mxu0 0
          %727 = vmatpush1.bf16.msra.mxu0 0
          %728 = vmatprep.subr.bf16.mxu0 0
          %729 = vmatpush1.bf16.msra.mxu0 0
          %730 = vmatprep.subr.bf16.mxu0 0
          %731 = vmatpush1.bf16.msra.mxu0 0
          %732 = vmatprep.subr.bf16.mxu0 0
          %733 = vmatpush1.bf16.msra.mxu0 0
          %734 = vmatprep.subr.bf16.mxu0 0
          %735 = vmatpush1.bf16.msra.mxu0 0
          %736 = vmatprep.subr.bf16.mxu0 0
          %737 = vmatpush1.bf16.msra.mxu0 0
          %738 = vmatprep.subr.bf16.mxu0 0
          %739 = vmatpush1.bf16.msra.mxu0 0
          %740 = vmatprep.subr.bf16.mxu0 0
          %741 = vmatpush1.bf16.msra.mxu0 0
          %742 = vmatprep.subr.bf16.mxu0 0
          %743 = vmatpush1.bf16.msra.mxu0 0
          %744 = vmatprep.subr.bf16.mxu0 0
          %745 = vmatpush1.bf16.msra.mxu0 0
          %746 = vmatprep.subr.bf16.mxu0 0
          %747 = vmatpush1.bf16.msra.mxu0 0
          %748 = vmatprep.mubr.bf16.mxu0 0
          %749 = vmatmul.mubr.bf16.gmra.mrb[0].mxu0 %v714
          %v750 = vpop.f32.mrb[0].mxu0
          %v751 = vadd.f32 0.0, %v750
          %v752 = vpop.f32.mrb[0].mxu0
          %v753 = vpop.f32.mrb[0].mxu0
          %v754 = vpop.f32.mrb[0].mxu0
          %755 = vdwg.mxu0
          %v756 = vpack.c.bf16 %v751, %v751
          %vm757 = vcmask 781312
          %758 = vst.msk [vmem:[#allocation2] sm:$0xf] %vm757, %v756
        $region132: #{tpu_custom_call.1} parent=75 // pred_fallthru
          _
        %s759 = smul.u32 %s43, 8
        %s760 = scalar_lea.vmem %s563, %s759 [#allocation5]
        %v761 = vld [vmem:[%s760] sm:$0xff]
        %v762 = vld [vmem:[#allocation11] sm:$0x1]
        %v763 = vld [vmem:[#allocation13] sm:$0x1]
        %vm764 = vcmask 261120
        %v765 = vsel %vm764, %v761, 0.0
        %766 = vadd.xlane.f32.xlu0 %v765
        %v767 = vpop.xlane.xlu0 %766
        %v768 = vrcp.pop 32.0
        %v769 = vmul.f32 %v767, %v768
        %v770 = vmul.f32 %v761, %v761
        %v771 = vsel %vm764, %v770, 0.0
        %772 = vadd.xlane.f32.xlu0 %v771
        %v773 = vpop.xlane.xlu0 %772
        %v774 = vmul.f32 %v773, %v768
        %v775 = vmul.f32 %v769, %v769
        %v776 = vsub.f32 %v774, %v775
        %v777 = vsub.f32 %v761, %v769
        %v778 = vadd.f32 %v776, 1e-05
        %v779 = vrsqrt.pop %v778
        %v780 = vmul.f32 %v777, %v779
        %v782 = vlaneseq
        %v783 = vshrl.u32 %v782, 7
        %v784 = vsub.s32 0, %v783
        %v785 = vrot.slane %v762, %v784
        %v787 = vmul.f32 %v780, %v785
        %v789 = vlaneseq
        %v790 = vshrl.u32 %v789, 7
        %v791 = vsub.s32 0, %v790
        %v792 = vrot.slane %v763, %v791
        %v794 = vadd.f32 %v787, %v792
        %v795 = vpack.c.bf16 %v794, %v794
        %v796 = vld [vmem:[#allocation8] sm:$0xf]
        %v797 = vld [vmem:[#allocation8 + $0x4] sm:$0xf]
        %v798 = vld [vmem:[#allocation8 + $0x8] sm:$0xf]
        %v799 = vld [vmem:[#allocation8 + $0xc] sm:$0xf]
        %v804 = vunpack.c.l.b16 %v796
        %v805 = vunpack.c.l.b16 %v797
        %v806 = vunpack.c.l.b16 %v798
        %v807 = vunpack.c.l.b16 %v799
        %v808 = vpack.c.b16 %v805, %v804
        %v809 = vpack.c.b16 %v807, %v806
        %v813 = vsel %vm764, %v795, 0
        %815 = vmatprep.subr.bf16.mxu0 0
        %816 = vmatpush1.bf16.msra.mxu0 %v808
        %817 = vmatprep.subr.bf16.mxu0 0
        %818 = vmatpush1.bf16.msra.mxu0 %v809
        %819 = vmatprep.subr.bf16.mxu0 0
        %820 = vmatpush1.bf16.msra.mxu0 0
        %821 = vmatprep.subr.bf16.mxu0 0
        %822 = vmatpush1.bf16.msra.mxu0 0
        %823 = vmatprep.subr.bf16.mxu0 0
        %824 = vmatpush1.bf16.msra.mxu0 0
        %825 = vmatprep.subr.bf16.mxu0 0
        %826 = vmatpush1.bf16.msra.mxu0 0
        %827 = vmatprep.subr.bf16.mxu0 0
        %828 = vmatpush1.bf16.msra.mxu0 0
        %829 = vmatprep.subr.bf16.mxu0 0
        %830 = vmatpush1.bf16.msra.mxu0 0
        %831 = vmatprep.subr.bf16.mxu0 0
        %832 = vmatpush1.bf16.msra.mxu0 0
        %833 = vmatprep.subr.bf16.mxu0 0
        %834 = vmatpush1.bf16.msra.mxu0 0
        %835 = vmatprep.subr.bf16.mxu0 0
        %836 = vmatpush1.bf16.msra.mxu0 0
        %837 = vmatprep.subr.bf16.mxu0 0
        %838 = vmatpush1.bf16.msra.mxu0 0
        %839 = vmatprep.subr.bf16.mxu0 0
        %840 = vmatpush1.bf16.msra.mxu0 0
        %841 = vmatprep.subr.bf16.mxu0 0
        %842 = vmatpush1.bf16.msra.mxu0 0
        %843 = vmatprep.subr.bf16.mxu0 0
        %844 = vmatpush1.bf16.msra.mxu0 0
        %845 = vmatprep.subr.bf16.mxu0 0
        %846 = vmatpush1.bf16.msra.mxu0 0
        %847 = vmatprep.mubr.bf16.mxu0 0
        %848 = vmatmul.mubr.bf16.gmra.mrb[0].mxu0 %v813
        %v849 = vpop.f32.mrb[0].mxu0
        %v850 = vadd.f32 0.0, %v849
        %v851 = vpop.f32.mrb[0].mxu0
        %v852 = vpop.f32.mrb[0].mxu0
        %v853 = vpop.f32.mrb[0].mxu0
        %854 = vdwg.mxu0
        %v855 = vpack.c.bf16 %v850, %v850
        %v856 = vld [vmem:[#allocation2] sm:$0xf]
        %vm857 = vcmask 64512
        %v859 = vsel %vm857, %v855, 0
        %v862 = vsel %vm857, %v856, 0
        %864 = vmatprep.subr.bf16.mxu0 0
        %865 = vmatpush1.bf16.xpose.msra.mxu0 %v862
        %866 = vmatprep.subr.bf16.mxu0 0
        %867 = vmatpush1.bf16.xpose.msra.mxu0 0
        %868 = vmatprep.subr.bf16.mxu0 0
        %869 = vmatpush1.bf16.xpose.msra.mxu0 0
        %870 = vmatprep.subr.bf16.mxu0 0
        %871 = vmatpush1.bf16.xpose.msra.mxu0 0
        %872 = vmatprep.subr.bf16.mxu0 0
        %873 = vmatpush1.bf16.xpose.msra.mxu0 0
        %874 = vmatprep.subr.bf16.mxu0 0
        %875 = vmatpush1.bf16.xpose.msra.mxu0 0
        %876 = vmatprep.subr.bf16.mxu0 0
        %877 = vmatpush1.bf16.xpose.msra.mxu0 0
        %878 = vmatprep.subr.bf16.mxu0 0
        %879 = vmatpush1.bf16.xpose.msra.mxu0 0
        %880 = vmatprep.subr.bf16.mxu0 0
        %881 = vmatpush1.bf16.xpose.msra.mxu0 0
        %882 = vmatprep.subr.bf16.mxu0 0
        %883 = vmatpush1.bf16.xpose.msra.mxu0 0
        %884 = vmatprep.subr.bf16.mxu0 0
        %885 = vmatpush1.bf16.xpose.msra.mxu0 0
        %886 = vmatprep.subr.bf16.mxu0 0
        %887 = vmatpush1.bf16.xpose.msra.mxu0 0
        %888 = vmatprep.subr.bf16.mxu0 0
        %889 = vmatpush1.bf16.xpose.msra.mxu0 0
        %890 = vmatprep.subr.bf16.mxu0 0
        %891 = vmatpush1.bf16.xpose.msra.mxu0 0
        %892 = vmatprep.subr.bf16.mxu0 0
        %893 = vmatpush1.bf16.xpose.msra.mxu0 0
        %894 = vmatprep.subr.bf16.mxu0 0
        %895 = vmatpush1.bf16.xpose.msra.mxu0 0
        %896 = vmatprep.mubr.bf16.mxu0 0
        %897 = vmatmul.mubr.bf16.gmra.mrb[0].mxu0 %v859
        %v898 = vpop.f32.mrb[0].mxu0
        %v899 = vadd.f32 0.0, %v898
        %v900 = vpop.f32.mrb[0].mxu0
        %v901 = vpop.f32.mrb[0].mxu0
        %v902 = vpop.f32.mrb[0].mxu0
        %903 = vdwg.mxu0
        %905 = vrot.lane.b32.xlu0 %v855, 96
        %v906 = vpop.permute.xlu0 %905
        %v908 = vunpack.c.l.b16 %v856
        %v909 = vpack.c.b16 %v908, %v908
        %910 = vrot.lane.b32.xlu0 %v909, 96
        %v911 = vpop.permute.xlu0 %910
        %v913 = vsel %vm857, %v906, 0
        %v916 = vsel %vm857, %v911, 0
        %918 = vmatprep.subr.bf16.mxu0 0
        %919 = vmatpush1.bf16.xpose.msra.mxu0 %v916
        %920 = vmatprep.subr.bf16.mxu0 0
        %921 = vmatpush1.bf16.xpose.msra.mxu0 0
        %922 = vmatprep.subr.bf16.mxu0 0
        %923 = vmatpush1.bf16.xpose.msra.mxu0 0
        %924 = vmatprep.subr.bf16.mxu0 0
        %925 = vmatpush1.bf16.xpose.msra.mxu0 0
        %926 = vmatprep.subr.bf16.mxu0 0
        %927 = vmatpush1.bf16.xpose.msra.mxu0 0
        %928 = vmatprep.subr.bf16.mxu0 0
        %929 = vmatpush1.bf16.xpose.msra.mxu0 0
        %930 = vmatprep.subr.bf16.mxu0 0
        %931 = vmatpush1.bf16.xpose.msra.mxu0 0
        %932 = vmatprep.subr.bf16.mxu0 0
        %933 = vmatpush1.bf16.xpose.msra.mxu0 0
        %934 = vmatprep.subr.bf16.mxu0 0
        %935 = vmatpush1.bf16.xpose.msra.mxu0 0
        %936 = vmatprep.subr.bf16.mxu0 0
        %937 = vmatpush1.bf16.xpose.msra.mxu0 0
        %938 = vmatprep.subr.bf16.mxu0 0
        %939 = vmatpush1.bf16.xpose.msra.mxu0 0
        %940 = vmatprep.subr.bf16.mxu0 0
        %941 = vmatpush1.bf16.xpose.msra.mxu0 0
        %942 = vmatprep.subr.bf16.mxu0 0
        %943 = vmatpush1.bf16.xpose.msra.mxu0 0
        %944 = vmatprep.subr.bf16.mxu0 0
        %945 = vmatpush1.bf16.xpose.msra.mxu0 0
        %946 = vmatprep.subr.bf16.mxu0 0
        %947 = vmatpush1.bf16.xpose.msra.mxu0 0
        %948 = vmatprep.subr.bf16.mxu0 0
        %949 = vmatpush1.bf16.xpose.msra.mxu0 0
        %950 = vmatprep.mubr.bf16.mxu0 0
        %951 = vmatmul.mubr.bf16.gmra.mrb[0].mxu0 %v913
        %v952 = vpop.f32.mrb[0].mxu0
        %v953 = vadd.f32 0.0, %v952
        %v954 = vpop.f32.mrb[0].mxu0
        %v955 = vpop.f32.mrb[0].mxu0
        %v956 = vpop.f32.mrb[0].mxu0
        %957 = vdwg.mxu0
        %v958 = vsel %vm857, %v899, -inf
        %959 = vmax.xlane.f32.xlu0 %v958
        %v960 = vpop.xlane.xlu0 %959
        %v961 = vsub.f32 %v899, %v960
        %v962 = vmul.f32 %v961, 1.442695
        %v963 = vpow.pop %v962
        %v964 = vsel %vm857, %v963, 0.0
        %965 = vadd.xlane.f32.xlu0 %v964
        %v966 = vpop.xlane.xlu0 %965
        %v967 = vrcp.pop %v966
        %v968 = vmul.f32 %v963, %v967
        %v969 = vsel %vm857, %v953, -inf
        %970 = vmax.xlane.f32.xlu0 %v969
        %v971 = vpop.xlane.xlu0 %970
        %v972 = vsub.f32 %v953, %v971
        %v973 = vmul.f32 %v972, 1.442695
        %v974 = vpow.pop %v973
        %v975 = vsel %vm857, %v974, 0.0
        %976 = vadd.xlane.f32.xlu0 %v975
        %v977 = vpop.xlane.xlu0 %976
        %v978 = vrcp.pop %v977
        %v979 = vmul.f32 %v974, %v978
        %v980 = vstv %s657
        %v981 = vmul.f32 %v980, %v979
        %v982 = vsub.f32 %v968, %v981
        %v983 = vpack.c.bf16 %v982, %v982
        %984 = vrot.lane.b32.xlu0 %v909, 64
        %v985 = vpop.permute.xlu0 %984
        %v987 = vsel %vm857, %v983, 0
        %vm989 = vcmask 1043456
        %v991 = vsel %vm989, %v985, 0
        %993 = vmatprep.subr.bf16.mxu0 0
        %994 = vmatpush1.bf16.msra.mxu0 %v991
        %995 = vmatprep.subr.bf16.mxu0 0
        %996 = vmatpush1.bf16.msra.mxu0 0
        %997 = vmatprep.subr.bf16.mxu0 0
        %998 = vmatpush1.bf16.msra.mxu0 0
        %999 = vmatprep.subr.bf16.mxu0 0
        %1000 = vmatpush1.bf16.msra.mxu0 0
        %1001 = vmatprep.subr.bf16.mxu0 0
        %1002 = vmatpush1.bf16.msra.mxu0 0
        %1003 = vmatprep.subr.bf16.mxu0 0
        %1004 = vmatpush1.bf16.msra.mxu0 0
        %1005 = vmatprep.subr.bf16.mxu0 0
        %1006 = vmatpush1.bf16.msra.mxu0 0
        %1007 = vmatprep.subr.bf16.mxu0 0
        %1008 = vmatpush1.bf16.msra.mxu0 0
        %1009 = vmatprep.subr.bf16.mxu0 0
        %1010 = vmatpush1.bf16.msra.mxu0 0
        %1011 = vmatprep.subr.bf16.mxu0 0
        %1012 = vmatpush1.bf16.msra.mxu0 0
        %1013 = vmatprep.subr.bf16.mxu0 0
        %1014 = vmatpush1.bf16.msra.mxu0 0
        %1015 = vmatprep.subr.bf16.mxu0 0
        %1016 = vmatpush1.bf16.msra.mxu0 0
        %1017 = vmatprep.subr.bf16.mxu0 0
        %1018 = vmatpush1.bf16.msra.mxu0 0
        %1019 = vmatprep.subr.bf16.mxu0 0
        %1020 = vmatpush1.bf16.msra.mxu0 0
        %1021 = vmatprep.subr.bf16.mxu0 0
        %1022 = vmatpush1.bf16.msra.mxu0 0
        %1023 = vmatprep.subr.bf16.mxu0 0
        %1024 = vmatpush1.bf16.msra.mxu0 0
        %1025 = vmatprep.mubr.bf16.mxu0 0
        %1026 = vmatmul.mubr.bf16.gmra.mrb[0].mxu0 %v987
        %v1027 = vpop.f32.mrb[0].mxu0
        %v1028 = vadd.f32 0.0, %v1027
        %v1029 = vpop.f32.mrb[0].mxu0
        %v1030 = vpop.f32.mrb[0].mxu0
        %v1031 = vpop.f32.mrb[0].mxu0
        %1032 = vdwg.mxu0
        %1033 = vst.msk [vmem:[#allocation3] sm:$0xff] %vm857, %v1028
        %1034 = vrot.lane.b32.xlu0 %v855, 120
        %v1035 = vpop.permute.xlu0 %1034
        %1036 = vrot.lane.b32.xlu0 %v909, 120
        %v1037 = vpop.permute.xlu0 %1036
        %v1039 = vsel %vm857, %v1035, 0
        %v1042 = vsel %vm857, %v1037, 0
        %1044 = vmatprep.subr.bf16.mxu0 0
        %1045 = vmatpush1.bf16.xpose.msra.mxu0 %v1042
        %1046 = vmatprep.subr.bf16.mxu0 0
        %1047 = vmatpush1.bf16.xpose.msra.mxu0 0
        %1048 = vmatprep.subr.bf16.mxu0 0
        %1049 = vmatpush1.bf16.xpose.msra.mxu0 0
        %1050 = vmatprep.subr.bf16.mxu0 0
        %1051 = vmatpush1.bf16.xpose.msra.mxu0 0
        %1052 = vmatprep.subr.bf16.mxu0 0
        %1053 = vmatpush1.bf16.xpose.msra.mxu0 0
        %1054 = vmatprep.subr.bf16.mxu0 0
        %1055 = vmatpush1.bf16.xpose.msra.mxu0 0
        %1056 = vmatprep.subr.bf16.mxu0 0
        %1057 = vmatpush1.bf16.xpose.msra.mxu0 0
        %1058 = vmatprep.subr.bf16.mxu0 0
        %1059 = vmatpush1.bf16.xpose.msra.mxu0 0
        %1060 = vmatprep.subr.bf16.mxu0 0
        %1061 = vmatpush1.bf16.xpose.msra.mxu0 0
        %1062 = vmatprep.subr.bf16.mxu0 0
        %1063 = vmatpush1.bf16.xpose.msra.mxu0 0
        %1064 = vmatprep.subr.bf16.mxu0 0
        %1065 = vmatpush1.bf16.xpose.msra.mxu0 0
        %1066 = vmatprep.subr.bf16.mxu0 0
        %1067 = vmatpush1.bf16.xpose.msra.mxu0 0
        %1068 = vmatprep.subr.bf16.mxu0 0
        %1069 = vmatpush1.bf16.xpose.msra.mxu0 0
        %1070 = vmatprep.subr.bf16.mxu0 0
        %1071 = vmatpush1.bf16.xpose.msra.mxu0 0
        %1072 = vmatprep.subr.bf16.mxu0 0
        %1073 = vmatpush1.bf16.xpose.msra.mxu0 0
        %1074 = vmatprep.subr.bf16.mxu0 0
        %1075 = vmatpush1.bf16.xpose.msra.mxu0 0
        %1076 = vmatprep.mubr.bf16.mxu0 0
        %1077 = vmatmul.mubr.bf16.gmra.mrb[0].mxu0 %v1039
        %v1078 = vpop.f32.mrb[0].mxu0
        %v1079 = vadd.f32 0.0, %v1078
        %v1080 = vpop.f32.mrb[0].mxu0
        %v1081 = vpop.f32.mrb[0].mxu0
        %v1082 = vpop.f32.mrb[0].mxu0
        %1083 = vdwg.mxu0
        %1084 = vrot.lane.b32.xlu0 %v855, 88
        %v1085 = vpop.permute.xlu0 %1084
        %1086 = vrot.lane.b32.xlu0 %v909, 88
        %v1087 = vpop.permute.xlu0 %1086
        %v1089 = vsel %vm857, %v1085, 0
        %v1092 = vsel %vm857, %v1087, 0
        %1094 = vmatprep.subr.bf16.mxu0 0
        %1095 = vmatpush1.bf16.xpose.msra.mxu0 %v1092
        %1096 = vmatprep.subr.bf16.mxu0 0
        %1097 = vmatpush1.bf16.xpose.msra.mxu0 0
        %1098 = vmatprep.subr.bf16.mxu0 0
        %1099 = vmatpush1.bf16.xpose.msra.mxu0 0
        %1100 = vmatprep.subr.bf16.mxu0 0
        %1101 = vmatpush1.bf16.xpose.msra.mxu0 0
        %1102 = vmatprep.subr.bf16.mxu0 0
        %1103 = vmatpush1.bf16.xpose.msra.mxu0 0
        %1104 = vmatprep.subr.bf16.mxu0 0
        %1105 = vmatpush1.bf16.xpose.msra.mxu0 0
        %1106 = vmatprep.subr.bf16.mxu0 0
        %1107 = vmatpush1.bf16.xpose.msra.mxu0 0
        %1108 = vmatprep.subr.bf16.mxu0 0
        %1109 = vmatpush1.bf16.xpose.msra.mxu0 0
        %1110 = vmatprep.subr.bf16.mxu0 0
        %1111 = vmatpush1.bf16.xpose.msra.mxu0 0
        %1112 = vmatprep.subr.bf16.mxu0 0
        %1113 = vmatpush1.bf16.xpose.msra.mxu0 0
        %1114 = vmatprep.subr.bf16.mxu0 0
        %1115 = vmatpush1.bf16.xpose.msra.mxu0 0
        %1116 = vmatprep.subr.bf16.mxu0 0
        %1117 = vmatpush1.bf16.xpose.msra.mxu0 0
        %1118 = vmatprep.subr.bf16.mxu0 0
        %1119 = vmatpush1.bf16.xpose.msra.mxu0 0
        %1120 = vmatprep.subr.bf16.mxu0 0
        %1121 = vmatpush1.bf16.xpose.msra.mxu0 0
        %1122 = vmatprep.subr.bf16.mxu0 0
        %1123 = vmatpush1.bf16.xpose.msra.mxu0 0
        %1124 = vmatprep.subr.bf16.mxu0 0
        %1125 = vmatpush1.bf16.xpose.msra.mxu0 0
        %1126 = vmatprep.mubr.bf16.mxu0 0
        %1127 = vmatmul.mubr.bf16.gmra.mrb[0].mxu0 %v1089
        %v1128 = vpop.f32.mrb[0].mxu0
        %v1129 = vadd.f32 0.0, %v1128
        %v1130 = vpop.f32.mrb[0].mxu0
        %v1131 = vpop.f32.mrb[0].mxu0
        %v1132 = vpop.f32.mrb[0].mxu0
        %1133 = vdwg.mxu0
        %v1134 = vsel %vm857, %v1079, -inf
        %1135 = vmax.xlane.f32.xlu0 %v1134
        %v1136 = vpop.xlane.xlu0 %1135
        %v1137 = vsub.f32 %v1079, %v1136
        %v1138 = vmul.f32 %v1137, 1.442695
        %v1139 = vpow.pop %v1138
        %v1140 = vsel %vm857, %v1139, 0.0
        %1141 = vadd.xlane.f32.xlu0 %v1140
        %v1142 = vpop.xlane.xlu0 %1141
        %v1143 = vrcp.pop %v1142
        %v1144 = vmul.f32 %v1139, %v1143
        %v1145 = vsel %vm857, %v1129, -inf
        %1146 = vmax.xlane.f32.xlu0 %v1145
        %v1147 = vpop.xlane.xlu0 %1146
        %v1148 = vsub.f32 %v1129, %v1147
        %v1149 = vmul.f32 %v1148, 1.442695
        %v1150 = vpow.pop %v1149
        %v1151 = vsel %vm857, %v1150, 0.0
        %1152 = vadd.xlane.f32.xlu0 %v1151
        %v1153 = vpop.xlane.xlu0 %1152
        %v1154 = vrcp.pop %v1153
        %v1155 = vmul.f32 %v1150, %v1154
        %v1156 = vmul.f32 %v980, %v1155
        %v1157 = vsub.f32 %v1144, %v1156
        %v1158 = vpack.c.bf16 %v1157, %v1157
        %1159 = vrot.lane.b32.xlu0 %v909, 56
        %v1160 = vpop.permute.xlu0 %1159
        %v1162 = vsel %vm857, %v1158, 0
        %v1165 = vsel %vm989, %v1160, 0
        %1167 = vmatprep.subr.bf16.mxu0 0
        %1168 = vmatpush1.bf16.msra.mxu0 %v1165
        %1169 = vmatprep.subr.bf16.mxu0 0
        %1170 = vmatpush1.bf16.msra.mxu0 0
        %1171 = vmatprep.subr.bf16.mxu0 0
        %1172 = vmatpush1.bf16.msra.mxu0 0
        %1173 = vmatprep.subr.bf16.mxu0 0
        %1174 = vmatpush1.bf16.msra.mxu0 0
        %1175 = vmatprep.subr.bf16.mxu0 0
        %1176 = vmatpush1.bf16.msra.mxu0 0
        %1177 = vmatprep.subr.bf16.mxu0 0
        %1178 = vmatpush1.bf16.msra.mxu0 0
        %1179 = vmatprep.subr.bf16.mxu0 0
        %1180 = vmatpush1.bf16.msra.mxu0 0
        %1181 = vmatprep.subr.bf16.mxu0 0
        %1182 = vmatpush1.bf16.msra.mxu0 0
        %1183 = vmatprep.subr.bf16.mxu0 0
        %1184 = vmatpush1.bf16.msra.mxu0 0
        %1185 = vmatprep.subr.bf16.mxu0 0
        %1186 = vmatpush1.bf16.msra.mxu0 0
        %1187 = vmatprep.subr.bf16.mxu0 0
        %1188 = vmatpush1.bf16.msra.mxu0 0
        %1189 = vmatprep.subr.bf16.mxu0 0
        %1190 = vmatpush1.bf16.msra.mxu0 0
        %1191 = vmatprep.subr.bf16.mxu0 0
        %1192 = vmatpush1.bf16.msra.mxu0 0
        %1193 = vmatprep.subr.bf16.mxu0 0
        %1194 = vmatpush1.bf16.msra.mxu0 0
        %1195 = vmatprep.subr.bf16.mxu0 0
        %1196 = vmatpush1.bf16.msra.mxu0 0
        %1197 = vmatprep.subr.bf16.mxu0 0
        %1198 = vmatpush1.bf16.msra.mxu0 0
        %1199 = vmatprep.mubr.bf16.mxu0 0
        %1200 = vmatmul.mubr.bf16.gmra.mrb[0].mxu0 %v1162
        %v1201 = vpop.f32.mrb[0].mxu0
        %v1202 = vadd.f32 0.0, %v1201
        %v1203 = vpop.f32.mrb[0].mxu0
        %v1204 = vpop.f32.mrb[0].mxu0
        %v1205 = vpop.f32.mrb[0].mxu0
        %1206 = vdwg.mxu0
        %1208 = vrot.lane.b32.xlu0 %v1202, 8
        %v1209 = vpop.permute.xlu0 %1208
        %vm1211 = vcmask 130112
        %1212 = vst.msk [vmem:[#allocation3] sm:$0xff] %vm1211, %v1209
        %1213 = vrot.lane.b32.xlu0 %v855, 112
        %v1214 = vpop.permute.xlu0 %1213
        %1215 = vrot.lane.b32.xlu0 %v909, 112
        %v1216 = vpop.permute.xlu0 %1215
        %v1218 = vsel %vm857, %v1214, 0
        %v1221 = vsel %vm857, %v1216, 0
        %1223 = vmatprep.subr.bf16.mxu0 0
        %1224 = vmatpush1.bf16.xpose.msra.mxu0 %v1221
        %1225 = vmatprep.subr.bf16.mxu0 0
        %1226 = vmatpush1.bf16.xpose.msra.mxu0 0
        %1227 = vmatprep.subr.bf16.mxu0 0
        %1228 = vmatpush1.bf16.xpose.msra.mxu0 0
        %1229 = vmatprep.subr.bf16.mxu0 0
        %1230 = vmatpush1.bf16.xpose.msra.mxu0 0
        %1231 = vmatprep.subr.bf16.mxu0 0
        %1232 = vmatpush1.bf16.xpose.msra.mxu0 0
        %1233 = vmatprep.subr.bf16.mxu0 0
        %1234 = vmatpush1.bf16.xpose.msra.mxu0 0
        %1235 = vmatprep.subr.bf16.mxu0 0
        %1236 = vmatpush1.bf16.xpose.msra.mxu0 0
        %1237 = vmatprep.subr.bf16.mxu0 0
        %1238 = vmatpush1.bf16.xpose.msra.mxu0 0
        %1239 = vmatprep.subr.bf16.mxu0 0
        %1240 = vmatpush1.bf16.xpose.msra.mxu0 0
        %1241 = vmatprep.subr.bf16.mxu0 0
        %1242 = vmatpush1.bf16.xpose.msra.mxu0 0
        %1243 = vmatprep.subr.bf16.mxu0 0
        %1244 = vmatpush1.bf16.xpose.msra.mxu0 0
        %1245 = vmatprep.subr.bf16.mxu0 0
        %1246 = vmatpush1.bf16.xpose.msra.mxu0 0
        %1247 = vmatprep.subr.bf16.mxu0 0
        %1248 = vmatpush1.bf16.xpose.msra.mxu0 0
        %1249 = vmatprep.subr.bf16.mxu0 0
        %1250 = vmatpush1.bf16.xpose.msra.mxu0 0
        %1251 = vmatprep.subr.bf16.mxu0 0
        %1252 = vmatpush1.bf16.xpose.msra.mxu0 0
        %1253 = vmatprep.subr.bf16.mxu0 0
        %1254 = vmatpush1.bf16.xpose.msra.mxu0 0
        %1255 = vmatprep.mubr.bf16.mxu0 0
        %1256 = vmatmul.mubr.bf16.gmra.mrb[0].mxu0 %v1218
        %v1257 = vpop.f32.mrb[0].mxu0
        %v1258 = vadd.f32 0.0, %v1257
        %v1259 = vpop.f32.mrb[0].mxu0
        %v1260 = vpop.f32.mrb[0].mxu0
        %v1261 = vpop.f32.mrb[0].mxu0
        %1262 = vdwg.mxu0
        %1263 = vrot.lane.b32.xlu0 %v855, 80
        %v1264 = vpop.permute.xlu0 %1263
        %1265 = vrot.lane.b32.xlu0 %v909, 80
        %v1266 = vpop.permute.xlu0 %1265
        %v1268 = vsel %vm857, %v1264, 0
        %v1271 = vsel %vm857, %v1266, 0
        %1273 = vmatprep.subr.bf16.mxu0 0
        %1274 = vmatpush1.bf16.xpose.msra.mxu0 %v1271
        %1275 = vmatprep.subr.bf16.mxu0 0
        %1276 = vmatpush1.bf16.xpose.msra.mxu0 0
        %1277 = vmatprep.subr.bf16.mxu0 0
        %1278 = vmatpush1.bf16.xpose.msra.mxu0 0
        %1279 = vmatprep.subr.bf16.mxu0 0
        %1280 = vmatpush1.bf16.xpose.msra.mxu0 0
        %1281 = vmatprep.subr.bf16.mxu0 0
        %1282 = vmatpush1.bf16.xpose.msra.mxu0 0
        %1283 = vmatprep.subr.bf16.mxu0 0
        %1284 = vmatpush1.bf16.xpose.msra.mxu0 0
        %1285 = vmatprep.subr.bf16.mxu0 0
        %1286 = vmatpush1.bf16.xpose.msra.mxu0 0
        %1287 = vmatprep.subr.bf16.mxu0 0
        %1288 = vmatpush1.bf16.xpose.msra.mxu0 0
        %1289 = vmatprep.subr.bf16.mxu0 0
        %1290 = vmatpush1.bf16.xpose.msra.mxu0 0
        %1291 = vmatprep.subr.bf16.mxu0 0
        %1292 = vmatpush1.bf16.xpose.msra.mxu0 0
        %1293 = vmatprep.subr.bf16.mxu0 0
        %1294 = vmatpush1.bf16.xpose.msra.mxu0 0
        %1295 = vmatprep.subr.bf16.mxu0 0
        %1296 = vmatpush1.bf16.xpose.msra.mxu0 0
        %1297 = vmatprep.subr.bf16.mxu0 0
        %1298 = vmatpush1.bf16.xpose.msra.mxu0 0
        %1299 = vmatprep.subr.bf16.mxu0 0
        %1300 = vmatpush1.bf16.xpose.msra.mxu0 0
        %1301 = vmatprep.subr.bf16.mxu0 0
        %1302 = vmatpush1.bf16.xpose.msra.mxu0 0
        %1303 = vmatprep.subr.bf16.mxu0 0
        %1304 = vmatpush1.bf16.xpose.msra.mxu0 0
        %1305 = vmatprep.mubr.bf16.mxu0 0
        %1306 = vmatmul.mubr.bf16.gmra.mrb[0].mxu0 %v1268
        %v1307 = vpop.f32.mrb[0].mxu0
        %v1308 = vadd.f32 0.0, %v1307
        %v1309 = vpop.f32.mrb[0].mxu0
        %v1310 = vpop.f32.mrb[0].mxu0
        %v1311 = vpop.f32.mrb[0].mxu0
        %1312 = vdwg.mxu0
        %v1313 = vsel %vm857, %v1258, -inf
        %1314 = vmax.xlane.f32.xlu0 %v1313
        %v1315 = vpop.xlane.xlu0 %1314
        %v1316 = vsub.f32 %v1258, %v1315
        %v1317 = vmul.f32 %v1316, 1.442695
        %v1318 = vpow.pop %v1317
        %v1319 = vsel %vm857, %v1318, 0.0
        %1320 = vadd.xlane.f32.xlu0 %v1319
        %v1321 = vpop.xlane.xlu0 %1320
        %v1322 = vrcp.pop %v1321
        %v1323 = vmul.f32 %v1318, %v1322
        %v1324 = vsel %vm857, %v1308, -inf
        %1325 = vmax.xlane.f32.xlu0 %v1324
        %v1326 = vpop.xlane.xlu0 %1325
        %v1327 = vsub.f32 %v1308, %v1326
        %v1328 = vmul.f32 %v1327, 1.442695
        %v1329 = vpow.pop %v1328
        %v1330 = vsel %vm857, %v1329, 0.0
        %1331 = vadd.xlane.f32.xlu0 %v1330
        %v1332 = vpop.xlane.xlu0 %1331
        %v1333 = vrcp.pop %v1332
        %v1334 = vmul.f32 %v1329, %v1333
        %v1335 = vmul.f32 %v980, %v1334
        %v1336 = vsub.f32 %v1323, %v1335
        %v1337 = vpack.c.bf16 %v1336, %v1336
        %1338 = vrot.lane.b32.xlu0 %v909, 48
        %v1339 = vpop.permute.xlu0 %1338
        %v1341 = vsel %vm857, %v1337, 0
        %v1344 = vsel %vm989, %v1339, 0
        %1346 = vmatprep.subr.bf16.mxu0 0
        %1347 = vmatpush1.bf16.msra.mxu0 %v1344
        %1348 = vmatprep.subr.bf16.mxu0 0
        %1349 = vmatpush1.bf16.msra.mxu0 0
        %1350 = vmatprep.subr.bf16.mxu0 0
        %1351 = vmatpush1.bf16.msra.mxu0 0
        %1352 = vmatprep.subr.bf16.mxu0 0
        %1353 = vmatpush1.bf16.msra.mxu0 0
        %1354 = vmatprep.subr.bf16.mxu0 0
        %1355 = vmatpush1.bf16.msra.mxu0 0
        %1356 = vmatprep.subr.bf16.mxu0 0
        %1357 = vmatpush1.bf16.msra.mxu0 0
        %1358 = vmatprep.subr.bf16.mxu0 0
        %1359 = vmatpush1.bf16.msra.mxu0 0
        %1360 = vmatprep.subr.bf16.mxu0 0
        %1361 = vmatpush1.bf16.msra.mxu0 0
        %1362 = vmatprep.subr.bf16.mxu0 0
        %1363 = vmatpush1.bf16.msra.mxu0 0
        %1364 = vmatprep.subr.bf16.mxu0 0
        %1365 = vmatpush1.bf16.msra.mxu0 0
        %1366 = vmatprep.subr.bf16.mxu0 0
        %1367 = vmatpush1.bf16.msra.mxu0 0
        %1368 = vmatprep.subr.bf16.mxu0 0
        %1369 = vmatpush1.bf16.msra.mxu0 0
        %1370 = vmatprep.subr.bf16.mxu0 0
        %1371 = vmatpush1.bf16.msra.mxu0 0
        %1372 = vmatprep.subr.bf16.mxu0 0
        %1373 = vmatpush1.bf16.msra.mxu0 0
        %1374 = vmatprep.subr.bf16.mxu0 0
        %1375 = vmatpush1.bf16.msra.mxu0 0
        %1376 = vmatprep.subr.bf16.mxu0 0
        %1377 = vmatpush1.bf16.msra.mxu0 0
        %1378 = vmatprep.mubr.bf16.mxu0 0
        %1379 = vmatmul.mubr.bf16.gmra.mrb[0].mxu0 %v1341
        %v1380 = vpop.f32.mrb[0].mxu0
        %v1381 = vadd.f32 0.0, %v1380
        %v1382 = vpop.f32.mrb[0].mxu0
        %v1383 = vpop.f32.mrb[0].mxu0
        %v1384 = vpop.f32.mrb[0].mxu0
        %1385 = vdwg.mxu0
        %1387 = vrot.lane.b32.xlu0 %v1381, 16
        %v1388 = vpop.permute.xlu0 %1387
        %vm1390 = vcmask 195712
        %1391 = vst.msk [vmem:[#allocation3] sm:$0xff] %vm1390, %v1388
        %1392 = vrot.lane.b32.xlu0 %v855, 104
        %v1393 = vpop.permute.xlu0 %1392
        %1394 = vrot.lane.b32.xlu0 %v909, 104
        %v1395 = vpop.permute.xlu0 %1394
        %v1397 = vsel %vm857, %v1393, 0
        %v1400 = vsel %vm857, %v1395, 0
        %1402 = vmatprep.subr.bf16.mxu0 0
        %1403 = vmatpush1.bf16.xpose.msra.mxu0 %v1400
        %1404 = vmatprep.subr.bf16.mxu0 0
        %1405 = vmatpush1.bf16.xpose.msra.mxu0 0
        %1406 = vmatprep.subr.bf16.mxu0 0
        %1407 = vmatpush1.bf16.xpose.msra.mxu0 0
        %1408 = vmatprep.subr.bf16.mxu0 0
        %1409 = vmatpush1.bf16.xpose.msra.mxu0 0
        %1410 = vmatprep.subr.bf16.mxu0 0
        %1411 = vmatpush1.bf16.xpose.msra.mxu0 0
        %1412 = vmatprep.subr.bf16.mxu0 0
        %1413 = vmatpush1.bf16.xpose.msra.mxu0 0
        %1414 = vmatprep.subr.bf16.mxu0 0
        %1415 = vmatpush1.bf16.xpose.msra.mxu0 0
        %1416 = vmatprep.subr.bf16.mxu0 0
        %1417 = vmatpush1.bf16.xpose.msra.mxu0 0
        %1418 = vmatprep.subr.bf16.mxu0 0
        %1419 = vmatpush1.bf16.xpose.msra.mxu0 0
        %1420 = vmatprep.subr.bf16.mxu0 0
        %1421 = vmatpush1.bf16.xpose.msra.mxu0 0
        %1422 = vmatprep.subr.bf16.mxu0 0
        %1423 = vmatpush1.bf16.xpose.msra.mxu0 0
        %1424 = vmatprep.subr.bf16.mxu0 0
        %1425 = vmatpush1.bf16.xpose.msra.mxu0 0
        %1426 = vmatprep.subr.bf16.mxu0 0
        %1427 = vmatpush1.bf16.xpose.msra.mxu0 0
        %1428 = vmatprep.subr.bf16.mxu0 0
        %1429 = vmatpush1.bf16.xpose.msra.mxu0 0
        %1430 = vmatprep.subr.bf16.mxu0 0
        %1431 = vmatpush1.bf16.xpose.msra.mxu0 0
        %1432 = vmatprep.subr.bf16.mxu0 0
        %1433 = vmatpush1.bf16.xpose.msra.mxu0 0
        %1434 = vmatprep.mubr.bf16.mxu0 0
        %1435 = vmatmul.mubr.bf16.gmra.mrb[0].mxu0 %v1397
        %v1436 = vpop.f32.mrb[0].mxu0
        %v1437 = vadd.f32 0.0, %v1436
        %v1438 = vpop.f32.mrb[0].mxu0
        %v1439 = vpop.f32.mrb[0].mxu0
        %v1440 = vpop.f32.mrb[0].mxu0
        %1441 = vdwg.mxu0
        %1442 = vrot.lane.b32.xlu0 %v855, 72
        %v1443 = vpop.permute.xlu0 %1442
        %1444 = vrot.lane.b32.xlu0 %v909, 72
        %v1445 = vpop.permute.xlu0 %1444
        %v1447 = vsel %vm857, %v1443, 0
        %v1450 = vsel %vm857, %v1445, 0
        %1452 = vmatprep.subr.bf16.mxu0 0
        %1453 = vmatpush1.bf16.xpose.msra.mxu0 %v1450
        %1454 = vmatprep.subr.bf16.mxu0 0
        %1455 = vmatpush1.bf16.xpose.msra.mxu0 0
        %1456 = vmatprep.subr.bf16.mxu0 0
        %1457 = vmatpush1.bf16.xpose.msra.mxu0 0
        %1458 = vmatprep.subr.bf16.mxu0 0
        %1459 = vmatpush1.bf16.xpose.msra.mxu0 0
        %1460 = vmatprep.subr.bf16.mxu0 0
        %1461 = vmatpush1.bf16.xpose.msra.mxu0 0
        %1462 = vmatprep.subr.bf16.mxu0 0
        %1463 = vmatpush1.bf16.xpose.msra.mxu0 0
        %1464 = vmatprep.subr.bf16.mxu0 0
        %1465 = vmatpush1.bf16.xpose.msra.mxu0 0
        %1466 = vmatprep.subr.bf16.mxu0 0
        %1467 = vmatpush1.bf16.xpose.msra.mxu0 0
        %1468 = vmatprep.subr.bf16.mxu0 0
        %1469 = vmatpush1.bf16.xpose.msra.mxu0 0
        %1470 = vmatprep.subr.bf16.mxu0 0
        %1471 = vmatpush1.bf16.xpose.msra.mxu0 0
        %1472 = vmatprep.subr.bf16.mxu0 0
        %1473 = vmatpush1.bf16.xpose.msra.mxu0 0
        %1474 = vmatprep.subr.bf16.mxu0 0
        %1475 = vmatpush1.bf16.xpose.msra.mxu0 0
        %1476 = vmatprep.subr.bf16.mxu0 0
        %1477 = vmatpush1.bf16.xpose.msra.mxu0 0
        %1478 = vmatprep.subr.bf16.mxu0 0
        %1479 = vmatpush1.bf16.xpose.msra.mxu0 0
        %1480 = vmatprep.subr.bf16.mxu0 0
        %1481 = vmatpush1.bf16.xpose.msra.mxu0 0
        %1482 = vmatprep.subr.bf16.mxu0 0
        %1483 = vmatpush1.bf16.xpose.msra.mxu0 0
        %1484 = vmatprep.mubr.bf16.mxu0 0
        %1485 = vmatmul.mubr.bf16.gmra.mrb[0].mxu0 %v1447
        %v1486 = vpop.f32.mrb[0].mxu0
        %v1487 = vadd.f32 0.0, %v1486
        %v1488 = vpop.f32.mrb[0].mxu0
        %v1489 = vpop.f32.mrb[0].mxu0
        %v1490 = vpop.f32.mrb[0].mxu0
        %1491 = vdwg.mxu0
        %v1492 = vsel %vm857, %v1437, -inf
        %1493 = vmax.xlane.f32.xlu0 %v1492
        %v1494 = vpop.xlane.xlu0 %1493
        %v1495 = vsub.f32 %v1437, %v1494
        %v1496 = vmul.f32 %v1495, 1.442695
        %v1497 = vpow.pop %v1496
        %v1498 = vsel %vm857, %v1497, 0.0
        %1499 = vadd.xlane.f32.xlu0 %v1498
        %v1500 = vpop.xlane.xlu0 %1499
        %v1501 = vrcp.pop %v1500
        %v1502 = vmul.f32 %v1497, %v1501
        %v1503 = vsel %vm857, %v1487, -inf
        %1504 = vmax.xlane.f32.xlu0 %v1503
        %v1505 = vpop.xlane.xlu0 %1504
        %v1506 = vsub.f32 %v1487, %v1505
        %v1507 = vmul.f32 %v1506, 1.442695
        %v1508 = vpow.pop %v1507
        %v1509 = vsel %vm857, %v1508, 0.0
        %1510 = vadd.xlane.f32.xlu0 %v1509
        %v1511 = vpop.xlane.xlu0 %1510
        %v1512 = vrcp.pop %v1511
        %v1513 = vmul.f32 %v1508, %v1512
        %v1514 = vmul.f32 %v980, %v1513
        %v1515 = vsub.f32 %v1502, %v1514
        %v1516 = vpack.c.bf16 %v1515, %v1515
        %1517 = vrot.lane.b32.xlu0 %v909, 40
        %v1518 = vpop.permute.xlu0 %1517
        %v1520 = vsel %vm857, %v1516, 0
        %v1523 = vsel %vm989, %v1518, 0
        %1525 = vmatprep.subr.bf16.mxu0 0
        %1526 = vmatpush1.bf16.msra.mxu0 %v1523
        %1527 = vmatprep.subr.bf16.mxu0 0
        %1528 = vmatpush1.bf16.msra.mxu0 0
        %1529 = vmatprep.subr.bf16.mxu0 0
        %1530 = vmatpush1.bf16.msra.mxu0 0
        %1531 = vmatprep.subr.bf16.mxu0 0
        %1532 = vmatpush1.bf16.msra.mxu0 0
        %1533 = vmatprep.subr.bf16.mxu0 0
        %1534 = vmatpush1.bf16.msra.mxu0 0
        %1535 = vmatprep.subr.bf16.mxu0 0
        %1536 = vmatpush1.bf16.msra.mxu0 0
        %1537 = vmatprep.subr.bf16.mxu0 0
        %1538 = vmatpush1.bf16.msra.mxu0 0
        %1539 = vmatprep.subr.bf16.mxu0 0
        %1540 = vmatpush1.bf16.msra.mxu0 0
        %1541 = vmatprep.subr.bf16.mxu0 0
        %1542 = vmatpush1.bf16.msra.mxu0 0
        %1543 = vmatprep.subr.bf16.mxu0 0
        %1544 = vmatpush1.bf16.msra.mxu0 0
        %1545 = vmatprep.subr.bf16.mxu0 0
        %1546 = vmatpush1.bf16.msra.mxu0 0
        %1547 = vmatprep.subr.bf16.mxu0 0
        %1548 = vmatpush1.bf16.msra.mxu0 0
        %1549 = vmatprep.subr.bf16.mxu0 0
        %1550 = vmatpush1.bf16.msra.mxu0 0
        %1551 = vmatprep.subr.bf16.mxu0 0
        %1552 = vmatpush1.bf16.msra.mxu0 0
        %1553 = vmatprep.subr.bf16.mxu0 0
        %1554 = vmatpush1.bf16.msra.mxu0 0
        %1555 = vmatprep.subr.bf16.mxu0 0
        %1556 = vmatpush1.bf16.msra.mxu0 0
        %1557 = vmatprep.mubr.bf16.mxu0 0
        %1558 = vmatmul.mubr.bf16.gmra.mrb[0].mxu0 %v1520
        %v1559 = vpop.f32.mrb[0].mxu0
        %v1560 = vadd.f32 0.0, %v1559
        %v1561 = vpop.f32.mrb[0].mxu0
        %v1562 = vpop.f32.mrb[0].mxu0
        %v1563 = vpop.f32.mrb[0].mxu0
        %1564 = vdwg.mxu0
        %1566 = vrot.lane.b32.xlu0 %v1560, 24
        %v1567 = vpop.permute.xlu0 %1566
        %vm1569 = vcmask 261312
        %1570 = vst.msk [vmem:[#allocation3] sm:$0xff] %vm1569, %v1567
        %s1571 = ssub.f32 1.0, %s657
        %v1572 = vld [vmem:[#allocation3] sm:$0xff]
        %v1573 = vld [vmem:[#allocation17] sm:$0x1]
        %v1574 = vld [vmem:[#allocation19] sm:$0x1]
        %v1575 = vsel %vm764, %v1572, 0.0
        %1576 = vadd.xlane.f32.xlu0 %v1575
        %v1577 = vpop.xlane.xlu0 %1576
        %v1578 = vmul.f32 %v1577, %v768
        %v1579 = vmul.f32 %v1572, %v1572
        %v1580 = vsel %vm764, %v1579, 0.0
        %1581 = vadd.xlane.f32.xlu0 %v1580
        %v1582 = vpop.xlane.xlu0 %1581
        %v1583 = vmul.f32 %v1582, %v768
        %v1584 = vmul.f32 %v1578, %v1578
        %v1585 = vsub.f32 %v1583, %v1584
        %v1586 = vsub.f32 %v1572, %v1578
        %v1587 = vadd.f32 %v1585, 1e-05
        %v1588 = vrsqrt.pop %v1587
        %v1589 = vmul.f32 %v1586, %v1588
        %v1591 = vlaneseq
        %v1592 = vshrl.u32 %v1591, 7
        %v1593 = vsub.s32 0, %v1592
        %v1594 = vrot.slane %v1573, %v1593
        %v1596 = vmul.f32 %v1589, %v1594
        %v1598 = vlaneseq
        %v1599 = vshrl.u32 %v1598, 7
        %v1600 = vsub.s32 0, %v1599
        %v1601 = vrot.slane %v1574, %v1600
        %v1603 = vadd.f32 %v1596, %v1601
        %v1604 = vstv %s1571
        %v1605 = vmul.f32 %v1604, %v1603
        %v1606 = vadd.f32 %v761, %v1605
        %v1607 = vld [vmem:[#allocation14] sm:$0x1]
        %v1608 = vld [vmem:[#allocation16] sm:$0x1]
        %v1609 = vsel %vm764, %v1606, 0.0
        %1610 = vadd.xlane.f32.xlu0 %v1609
        %v1611 = vpop.xlane.xlu0 %1610
        %v1612 = vmul.f32 %v1611, %v768
        %v1613 = vmul.f32 %v1606, %v1606
        %v1614 = vsel %vm764, %v1613, 0.0
        %1615 = vadd.xlane.f32.xlu0 %v1614
        %v1616 = vpop.xlane.xlu0 %1615
        %v1617 = vmul.f32 %v1616, %v768
        %v1618 = vmul.f32 %v1612, %v1612
        %v1619 = vsub.f32 %v1617, %v1618
        %v1620 = vsub.f32 %v1606, %v1612
        %v1621 = vadd.f32 %v1619, 1e-05
        %v1622 = vrsqrt.pop %v1621
        %v1623 = vmul.f32 %v1620, %v1622
        %v1625 = vlaneseq
        %v1626 = vshrl.u32 %v1625, 7
        %v1627 = vsub.s32 0, %v1626
        %v1628 = vrot.slane %v1607, %v1627
        %v1630 = vmul.f32 %v1623, %v1628
        %v1632 = vlaneseq
        %v1633 = vshrl.u32 %v1632, 7
        %v1634 = vsub.s32 0, %v1633
        %v1635 = vrot.slane %v1608, %v1634
        %v1637 = vadd.f32 %v1630, %v1635
        %v1638 = vpack.c.bf16 %v1637, %v1637
        %v1639 = vld [vmem:[#allocation20] sm:$0xf]
        %v1640 = vld [vmem:[#allocation20 + $0x4] sm:$0xf]
        %v1641 = vld [vmem:[#allocation20 + $0x8] sm:$0xf]
        %v1642 = vld [vmem:[#allocation20 + $0xc] sm:$0xf]
        %v1643 = vld [vmem:[#allocation22] sm:$0x1]
        %v1645 = vlaneseq
        %v1646 = vshrl.u32 %v1645, 7
        %v1647 = vsub.s32 0, %v1646
        %v1648 = vrot.slane %v1643, %v1647
        %v1654 = vunpack.c.l.b16 %v1639
        %v1655 = vunpack.c.l.b16 %v1640
        %v1656 = vunpack.c.l.b16 %v1641
        %v1657 = vunpack.c.l.b16 %v1642
        %v1658 = vpack.c.b16 %v1655, %v1654
        %v1659 = vpack.c.b16 %v1657, %v1656
        %v1663 = vsel %vm764, %v1638, 0
        %1665 = vmatprep.subr.bf16.mxu0 0
        %1666 = vmatpush1.bf16.msra.mxu0 %v1658
        %1667 = vmatprep.subr.bf16.mxu0 0
        %1668 = vmatpush1.bf16.msra.mxu0 %v1659
        %1669 = vmatprep.subr.bf16.mxu0 0
        %1670 = vmatpush1.bf16.msra.mxu0 0
        %1671 = vmatprep.subr.bf16.mxu0 0
        %1672 = vmatpush1.bf16.msra.mxu0 0
        %1673 = vmatprep.subr.bf16.mxu0 0
        %1674 = vmatpush1.bf16.msra.mxu0 0
        %1675 = vmatprep.subr.bf16.mxu0 0
        %1676 = vmatpush1.bf16.msra.mxu0 0
        %1677 = vmatprep.subr.bf16.mxu0 0
        %1678 = vmatpush1.bf16.msra.mxu0 0
        %1679 = vmatprep.subr.bf16.mxu0 0
        %1680 = vmatpush1.bf16.msra.mxu0 0
        %1681 = vmatprep.subr.bf16.mxu0 0
        %1682 = vmatpush1.bf16.msra.mxu0 0
        %1683 = vmatprep.subr.bf16.mxu0 0
        %1684 = vmatpush1.bf16.msra.mxu0 0
        %1685 = vmatprep.subr.bf16.mxu0 0
        %1686 = vmatpush1.bf16.msra.mxu0 0
        %1687 = vmatprep.subr.bf16.mxu0 0
        %1688 = vmatpush1.bf16.msra.mxu0 0
        %1689 = vmatprep.subr.bf16.mxu0 0
        %1690 = vmatpush1.bf16.msra.mxu0 0
        %1691 = vmatprep.subr.bf16.mxu0 0
        %1692 = vmatpush1.bf16.msra.mxu0 0
        %1693 = vmatprep.subr.bf16.mxu0 0
        %1694 = vmatpush1.bf16.msra.mxu0 0
        %1695 = vmatprep.subr.bf16.mxu0 0
        %1696 = vmatpush1.bf16.msra.mxu0 0
        %1697 = vmatprep.mubr.bf16.mxu0 0
        %1698 = vmatmul.mubr.bf16.gmra.mrb[0].mxu0 %v1663
        %v1699 = vpop.f32.mrb[0].mxu0
        %v1700 = vadd.f32 %v1648, %v1699
        %v1701 = vpop.f32.mrb[0].mxu0
        %v1702 = vpop.f32.mrb[0].mxu0
        %v1703 = vpop.f32.mrb[0].mxu0
        %1704 = vdwg.mxu0
        %v1705 = vmax.f32 %v1700, 0.0
        %v1706 = vpack.c.bf16 %v1705, %v1705
        %v1707 = vld [vmem:[#allocation23] sm:$0xf]
        %v1708 = vld [vmem:[#allocation23 + $0x4] sm:$0xf]
        %v1709 = vld [vmem:[#allocation23 + $0x8] sm:$0xf]
        %v1710 = vld [vmem:[#allocation23 + $0xc] sm:$0xf]
        %v1711 = vld [vmem:[#allocation23 + $0x10] sm:$0xf]
        %v1712 = vld [vmem:[#allocation23 + $0x14] sm:$0xf]
        %v1713 = vld [vmem:[#allocation23 + $0x18] sm:$0xf]
        %v1714 = vld [vmem:[#allocation23 + $0x1c] sm:$0xf]
        %v1715 = vld [vmem:[#allocation23 + $0x20] sm:$0xf]
        %v1716 = vld [vmem:[#allocation23 + $0x24] sm:$0xf]
        %v1717 = vld [vmem:[#allocation23 + $0x28] sm:$0xf]
        %v1718 = vld [vmem:[#allocation23 + $0x2c] sm:$0xf]
        %v1719 = vld [vmem:[#allocation23 + $0x30] sm:$0xf]
        %v1720 = vld [vmem:[#allocation23 + $0x34] sm:$0xf]
        %v1721 = vld [vmem:[#allocation23 + $0x38] sm:$0xf]
        %v1722 = vld [vmem:[#allocation23 + $0x3c] sm:$0xf]
        %v1723 = vld [vmem:[#allocation25] sm:$0x1]
        %v1725 = vlaneseq
        %v1726 = vshrl.u32 %v1725, 7
        %v1727 = vsub.s32 0, %v1726
        %v1728 = vrot.slane %v1723, %v1727
        %v1746 = vunpack.c.l.b16 %v1707
        %v1747 = vunpack.c.l.b16 %v1708
        %v1748 = vunpack.c.l.b16 %v1709
        %v1749 = vunpack.c.l.b16 %v1710
        %v1750 = vunpack.c.l.b16 %v1711
        %v1751 = vunpack.c.l.b16 %v1712
        %v1752 = vunpack.c.l.b16 %v1713
        %v1753 = vunpack.c.l.b16 %v1714
        %v1754 = vunpack.c.l.b16 %v1715
        %v1755 = vunpack.c.l.b16 %v1716
        %v1756 = vunpack.c.l.b16 %v1717
        %v1757 = vunpack.c.l.b16 %v1718
        %v1758 = vunpack.c.l.b16 %v1719
        %v1759 = vunpack.c.l.b16 %v1720
        %v1760 = vunpack.c.l.b16 %v1721
        %v1761 = vunpack.c.l.b16 %v1722
        %v1762 = vpack.c.b16 %v1747, %v1746
        %v1763 = vpack.c.b16 %v1749, %v1748
        %v1764 = vpack.c.b16 %v1751, %v1750
        %v1765 = vpack.c.b16 %v1753, %v1752
        %v1766 = vpack.c.b16 %v1755, %v1754
        %v1767 = vpack.c.b16 %v1757, %v1756
        %v1768 = vpack.c.b16 %v1759, %v1758
        %v1769 = vpack.c.b16 %v1761, %v1760
        %1778 = vmatprep.subr.bf16.mxu0 0
        %1779 = vmatpush1.bf16.msra.mxu0 %v1762
        %1780 = vmatprep.subr.bf16.mxu0 0
        %1781 = vmatpush1.bf16.msra.mxu0 %v1763
        %1782 = vmatprep.subr.bf16.mxu0 0
        %1783 = vmatpush1.bf16.msra.mxu0 %v1764
        %1784 = vmatprep.subr.bf16.mxu0 0
        %1785 = vmatpush1.bf16.msra.mxu0 %v1765
        %1786 = vmatprep.subr.bf16.mxu0 0
        %1787 = vmatpush1.bf16.msra.mxu0 %v1766
        %1788 = vmatprep.subr.bf16.mxu0 0
        %1789 = vmatpush1.bf16.msra.mxu0 %v1767
        %1790 = vmatprep.subr.bf16.mxu0 0
        %1791 = vmatpush1.bf16.msra.mxu0 %v1768
        %1792 = vmatprep.subr.bf16.mxu0 0
        %1793 = vmatpush1.bf16.msra.mxu0 %v1769
        %1794 = vmatprep.subr.bf16.mxu0 0
        %1795 = vmatpush1.bf16.msra.mxu0 0
        %1796 = vmatprep.subr.bf16.mxu0 0
        %1797 = vmatpush1.bf16.msra.mxu0 0
        %1798 = vmatprep.subr.bf16.mxu0 0
        %1799 = vmatpush1.bf16.msra.mxu0 0
        %1800 = vmatprep.subr.bf16.mxu0 0
        %1801 = vmatpush1.bf16.msra.mxu0 0
        %1802 = vmatprep.subr.bf16.mxu0 0
        %1803 = vmatpush1.bf16.msra.mxu0 0
        %1804 = vmatprep.subr.bf16.mxu0 0
        %1805 = vmatpush1.bf16.msra.mxu0 0
        %1806 = vmatprep.subr.bf16.mxu0 0
        %1807 = vmatpush1.bf16.msra.mxu0 0
        %1808 = vmatprep.subr.bf16.mxu0 0
        %1809 = vmatpush1.bf16.msra.mxu0 0
        %1810 = vmatprep.mubr.bf16.mxu0 0
        %1811 = vmatmul.mubr.bf16.gmra.mrb[0].mxu0 %v1706
        %v1812 = vpop.f32.mrb[0].mxu0
        %v1813 = vadd.f32 %v1728, %v1812
        %v1814 = vpop.f32.mrb[0].mxu0
        %v1815 = vpop.f32.mrb[0].mxu0
        %v1816 = vpop.f32.mrb[0].mxu0
        %1817 = vdwg.mxu0
        %v1818 = vadd.f32 %v1606, %v1813
        %1819 = vst.msk [vmem:[%s655] sm:$0xff] %vm764, %v1818
        %s1820 = sand.u32 %s359, 1
        %s1821 = scalar_lea.sflag [#allocation7], %s1820
        %s1822 = sand.u32 %s359, 1
        %s1823 = smul.addr %s1822, 8
        %s1824 = scalar_lea.vmem [#allocation26], %s1823
        // Predicated region
        $region133: #{tpu_custom_call.1} parent=75 // pred_check
          %p1825 = pneg %p369
        $region134: #{tpu_custom_call.1} parent=75 // pred_check_branch
          %1827 = sbr.rel (%p1825) target = $region136
        $region135: #{tpu_custom_call.1} parent=75 // pred_region
          %s1829 = ssub.s32 128, 128
          %1830 = vsyncadd %s1821, %s1829
          %s1831 = sadd.s32 %s43, %s42
          %s1832 = smul.addr %s1831, 128
          %s1833 = scalar_lea.hbm %s14, %s1832
          %s1835 = sshll.u32 %s1824, 4
          %s1836 = int_to_ptr.vmem [resolvable:$true] %s1835
          %1838 = dma.vmem_to_hbm [thread:$0]  %s1836, 128, %s1833, %s1821
        $region136: #{tpu_custom_call.1} parent=75 // pred_fallthru
          _
      $region76: #{tpu_custom_call.1} parent=5 // pred_fallthru
        _
      %p1839 = scmp.le.s32.totalorder 2, %s33
      // Predicated region
      $region137: #{tpu_custom_call.1} parent=5 // pred_check
        %p1840 = pneg %p1839
      $region138: #{tpu_custom_call.1} parent=5 // pred_check_branch
        %1842 = sbr.rel (%p1840) target = $region140
      $region139: #{tpu_custom_call.1} parent=5 // pred_region
        %s1843 = ssub.s32 %s33, 2
        // Predicated region
        $region141: #{tpu_custom_call.1} parent=139 // pred_check
          %p1844 = pneg %p375
        $region142: #{tpu_custom_call.1} parent=139 // pred_check_branch
          %1846 = sbr.rel (%p1844) target = $region144
        $region143: #{tpu_custom_call.1} parent=139 // pred_region
          %s1847 = sand.u32 %s360, 1
          %s1848 = scalar_lea.sflag [#allocation7], %s1847
          %s1849 = sand.u32 %s360, 1
          %s1850 = smul.addr %s1849, 8
          %s1851 = scalar_lea.vmem [#allocation26], %s1850
          %1852 = dma.done %s1848, 128
        $region144: #{tpu_custom_call.1} parent=139 // pred_fallthru
          _
      $region140: #{tpu_custom_call.1} parent=5 // pred_fallthru
        _
    $region6: #{tpu_custom_call.1} parent=1 // loop_footer
      %s37 = sadd.s32 1, %s33
    $region7: #{tpu_custom_call.1} parent=1 // loop_footer_branch
      %32 = sbr.rel target = $region3
    $region8: #{tpu_custom_call.1} parent=1 // loop_exit
      _
    %1853 = vsyncpa [#allocation6], 1
    %s1854 = scalar_lea.sflag [#allocation6], 1
    %1855 = vsyncpa %s1854, 1
    %1856 = vsyncpa [#allocation9], 1
    %1857 = vsyncpa [#allocation12], 1
    %1858 = vsyncpa [#allocation15], 1
    %1859 = vsyncpa [#allocation18], 1
    %1860 = vsyncpa [#allocation21], 1
    %1861 = vsyncpa [#allocation24], 1
    %1862 = vsyncpa [#allocation7], 1
    %s1863 = scalar_lea.sflag [#allocation7], 1
    %1864 = vsyncpa %s1863, 1

</llo_original>
